<compile_context>
chip_gen: v5e
topology: v5e:2x2
jax: 0.10.0
libtpu: 0.0.40
codegen_flags: <defaults>
</compile_context>

<pallas_src>
import functools
import math

import jax
import jax.numpy as jnp
import numpy as np
from jax.experimental import pallas as pl
from jax.experimental.pallas import tpu as pltpu


def _layer_norm(x, gamma, beta, eps=1e-5):
    mu = jnp.mean(x, axis=-1, keepdims=True)
    var = jnp.mean((x - mu) ** 2, axis=-1, keepdims=True)
    return (x - mu) * jax.lax.rsqrt(var + eps) * gamma + beta


def encoder_layer_kernel(
    x_ref, bias_ref,
    wq_ref, wk_ref, wv_ref, wo_ref,
    g1_ref, be1_ref,
    w1_ref, b1_ref, w2_ref, b2_ref,
    g2_ref, be2_ref,
    o_ref,
    *, heads, d_k, seq, pre_ln, matmul_dtype,
):
    """One grid step == one encoder layer applied to one batch tile.

    The activation is carried across the (arbitrary) layer axis inside the
    output VMEM block `o_ref`; it is flushed to HBM only after the last layer.
    """
    layer = pl.program_id(1)

    # Layer 0: seed the VMEM-resident activation from the input block.
    @pl.when(layer == 0)
    def _():
        o_ref[...] = x_ref[...]

    x = o_ref[...].astype(jnp.float32)          # (R, D), R = batch_block * seq
    rows, d_model = x.shape
    bb = rows // seq

    # Additive mask bias; broadcast hoisted out of the head loop.
    bias3 = bias_ref[...][None, :, :]           # (1, S, S), -1e30 == masked

    g1, be1 = g1_ref[0], be1_ref[0]             # (1, D)
    g2, be2 = g2_ref[0], be2_ref[0]

    # ---------------- attention sub-layer ----------------
    res = x
    h_in = _layer_norm(x, g1, be1) if pre_ln else x
    h_mm = h_in.astype(matmul_dtype)

    attn = jnp.zeros((rows, d_model), jnp.float32)
    for h in range(heads):                      # static unroll (tiny H)
        wq_h = wq_ref[0, h]                     # (D, d_k); scale pre-folded
        wk_h = wk_ref[0, h]
        wv_h = wv_ref[0, h]
        wo_h = wo_ref[0, h]                     # (d_k, D)

        q = jnp.dot(h_mm, wq_h, preferred_element_type=jnp.float32)   # (R, d_k)
        k = jnp.dot(h_mm, wk_h, preferred_element_type=jnp.float32)
        v = jnp.dot(h_mm, wv_h, preferred_element_type=jnp.float32)

        # Split only the major (row) dim -> cheap, no lane relayout.
        q3 = q.reshape(bb, seq, d_k).astype(matmul_dtype)
        k3 = k.reshape(bb, seq, d_k).astype(matmul_dtype)
        v3 = v.reshape(bb, seq, d_k).astype(matmul_dtype)

        e = jnp.einsum("bqd,bkd->bqk", q3, k3,
                       preferred_element_type=jnp.float32) + bias3
        m = jnp.max(e, axis=-1, keepdims=True)
        p = jnp.exp(e - m)
        w = p * pl.reciprocal(jnp.sum(p, axis=-1, keepdims=True), approx=True)

        a = jnp.einsum("bqk,bkd->bqd", w.astype(matmul_dtype), v3,
                       preferred_element_type=jnp.float32)

        # Output projection accumulated per head (== concat(heads) @ W_O),
        # avoiding any lane-axis concatenate.
        attn = attn + jnp.dot(a.reshape(rows, d_k).astype(matmul_dtype), wo_h,
                              preferred_element_type=jnp.float32)

    x = attn + res                              # dropout == identity (eval)
    if not pre_ln:
        x = _layer_norm(x, g1, be1)

    # ---------------- feed-forward sub-layer ----------------
    res = x
    h_in = _layer_norm(x, g2, be2) if pre_ln else x

    hh = jnp.dot(h_in.astype(matmul_dtype), w1_ref[0],
                 preferred_element_type=jnp.float32) + b1_ref[0]
    hh = jnp.dot(hh.astype(matmul_dtype), w2_ref[0],
                 preferred_element_type=jnp.float32) + b2_ref[0]
    # NOTE: the PyTorch FFN is Sequential(Linear, Linear, ReLU) -> ReLU comes
    # AFTER the second linear.  This intentionally matches the module.
    hh = jnp.maximum(hh, 0.0)

    x = hh + res                                # dropout == identity (eval)
    if not pre_ln:
        x = _layer_norm(x, g2, be2)

    o_ref[...] = x.astype(o_ref.dtype)


def _stack_params(params_list, heads, matmul_dtype):
    """Stack per-layer params along a leading layer axis, pre-split the
    attention weights per head, and fold 1/sqrt(d_k) into W_Q (done once, in
    plain JAX, outside the kernel)."""
    n = len(params_list)
    stack = lambda key: jnp.stack([p[key] for p in params_list], axis=0)
    wq, wk, wv, wo = stack("wq"), stack("wk"), stack("wv"), stack("wo")
    d_model = wq.shape[-1]
    d_k = d_model // heads
    wq = wq * (1.0 / math.sqrt(d_k))            # fold attention scale into W_Q

    def split_cols(w):   # (N, D, D) -> (N, H, D, d_k): output features per head
        return w.reshape(n, d_model, heads, d_k).transpose(0, 2, 1, 3)

    def split_rows(w):   # (N, D, D) -> (N, H, d_k, D): input features per head
        return w.reshape(n, heads, d_k, d_model)

    return {
        "wq": split_cols(wq).astype(matmul_dtype),
        "wk": split_cols(wk).astype(matmul_dtype),
        "wv": split_cols(wv).astype(matmul_dtype),
        "wo": split_rows(wo).astype(matmul_dtype),
        "g1": stack("g1"), "be1": stack("be1"),
        "w1": stack("w1").astype(matmul_dtype), "bb1": stack("bb1"),
        "w2": stack("w2").astype(matmul_dtype), "bb2": stack("bb2"),
        "g2": stack("g2"), "be2": stack("be2"),
    }


def encoder_forward(x, mask, params_list, *, heads, pre_ln,
                    batch_block=None, matmul_dtype=jnp.float32):
    """x: (B, S, D) f32; mask: (S, S) bool (True == masked)."""
    B, S, D = x.shape
    n_layers = len(params_list)
    d_ff = params_list[0]["w1"].shape[-1]
    d_k = D // heads

    if batch_block is None:
        batch_block = B            # collapse the whole batch into one tile
    assert B % batch_block == 0
    nbt = B // batch_block
    rows = batch_block * S

    sp = _stack_params(params_list, heads, matmul_dtype)

    # Hoisted additive mask bias (finite large negative -> no exp(-inf) NaNs).
    bias = jnp.where(mask, -1e30, 0.0).astype(jnp.float32)
    x2d = x.reshape(B * S, D).astype(jnp.float32)

    kernel = functools.partial(
        encoder_layer_kernel, heads=heads, d_k=d_k, seq=S,
        pre_ln=pre_ln, matmul_dtype=matmul_dtype)

    wspec3 = lambda a, b: pl.BlockSpec((1, a, b), lambda bt, l: (l, 0, 0))
    wspec4 = lambda a, b, c: pl.BlockSpec((1, a, b, c), lambda bt, l: (l, 0, 0, 0))

    out2d = pl.pallas_call(
        kernel,
        out_shape=jax.ShapeDtypeStruct((B * S, D), jnp.float32),
        grid=(nbt, n_layers),
        in_specs=[
            pl.BlockSpec((rows, D), lambda bt, l: (bt, 0)),   # x (fetched once/tile)
            pl.BlockSpec((S, S), lambda bt, l: (0, 0)),       # additive mask bias
            wspec4(heads, D, d_k),                            # W_Q (head-split, pre-scaled)
            wspec4(heads, D, d_k),                            # W_K
            wspec4(heads, D, d_k),                            # W_V
            wspec4(heads, d_k, D),                            # W_O (head-split rows)
            wspec3(1, D), wspec3(1, D),                       # ln1 gamma, beta
            wspec3(D, d_ff), wspec3(1, d_ff),                 # ffn W1, b1
            wspec3(d_ff, D), wspec3(1, D),                    # ffn W2, b2
            wspec3(1, D), wspec3(1, D),                       # ln2 gamma, beta
        ],
        out_specs=pl.BlockSpec((rows, D), lambda bt, l: (bt, 0)),
        compiler_params=pltpu.CompilerParams(
            dimension_semantics=("parallel", "arbitrary"),
            vmem_limit_bytes=32 * 1024 * 1024,
        ),
    )(x2d, bias, sp["wq"], sp["wk"], sp["wv"], sp["wo"],
      sp["g1"], sp["be1"], sp["w1"], sp["bb1"], sp["w2"], sp["bb2"],
      sp["g2"], sp["be2"])

    return out2d.reshape(B, S, D)


# ------------------------- pure-JAX reference --------------------------------
def _ref_block(x, mask_b, p, heads, pre_ln):
    B, S, D = x.shape
    d_k = D // heads

    def ln(v, g, b):
        mu = jnp.mean(v, axis=-1, keepdims=True)
        var = jnp.mean((v - mu) ** 2, axis=-1, keepdims=True)
        return (v - mu) / jnp.sqrt(var + 1e-5) * g + b

    res = x
    h_in = ln(x, p["g1"], p["be1"]) if pre_ln else x
    q = h_in @ p["wq"]
    k = h_in @ p["wk"]
    v = h_in @ p["wv"]
    q = q.reshape(B, S, heads, d_k).transpose(0, 2, 1, 3)
    k = k.reshape(B, S, heads, d_k).transpose(0, 2, 1, 3)
    v = v.reshape(B, S, heads, d_k).transpose(0, 2, 1, 3)
    e = (q @ k.transpose(0, 1, 3, 2)) / math.sqrt(d_k)
    e = jnp.where(mask_b[None, None, :, :], -jnp.inf, e)
    w = jax.nn.softmax(e, axis=-1)
    a = (w @ v).transpose(0, 2, 1, 3).reshape(B, S, D)
    x = a @ p["wo"] + res
    if not pre_ln:
        x = ln(x, p["g1"], p["be1"])
    res = x
    h_in = ln(x, p["g2"], p["be2"]) if pre_ln else x
    h = h_in @ p["w1"] + p["bb1"]
    h = h @ p["w2"] + p["bb2"]
    h = jnp.maximum(h, 0.0)
    x = h + res
    if not pre_ln:
        x = ln(x, p["g2"], p["be2"])
    return x


def _ref_forward(x, mask_b, params, heads, pre_ln):
    for p in params:
        x = _ref_block(x, mask_b, p, heads, pre_ln)
    return x


# ------------------------------- main -----------------------------------------
if __name__ == "__main__":
    # Config consistent with the module constructor:
    # Encoder(N=2, heads=4, d_model=32, d_ff=64, pre_ln=False)
    N, heads, d_model, d_ff, pre_ln = 2, 4, 32, 64, False
    B, S = 2, 8

    key = jax.random.PRNGKey(0)
    key, kx = jax.random.split(key)
    x = jax.random.normal(kx, (B, S, d_model), dtype=jnp.float32)

    # Padding-style mask: last 2 key positions are masked for every query.
    mask_b = jnp.zeros((S, S), dtype=bool).at[:, S - 2:].set(True)

    params = []
    for _ in range(N):
        ks = jax.random.split(key, 9)
        key = ks[0]
        p = {
            "wq": 0.05 * jax.random.normal(ks[1], (d_model, d_model), jnp.float32),
            "wk": 0.05 * jax.random.normal(ks[2], (d_model, d_model), jnp.float32),
            "wv": 0.05 * jax.random.normal(ks[3], (d_model, d_model), jnp.float32),
            "wo": 0.05 * jax.random.normal(ks[4], (d_model, d_model), jnp.float32),
            "g1": jnp.ones((1, d_model), jnp.float32),
            "be1": jnp.zeros((1, d_model), jnp.float32),
            "w1": 0.05 * jax.random.normal(ks[5], (d_model, d_ff), jnp.float32),
            "bb1": 0.05 * jax.random.normal(ks[6], (1, d_ff), jnp.float32),
            "w2": 0.05 * jax.random.normal(ks[7], (d_ff, d_model), jnp.float32),
            "bb2": 0.05 * jax.random.normal(ks[8], (1, d_model), jnp.float32),
            "g2": jnp.ones((1, d_model), jnp.float32),
            "be2": jnp.zeros((1, d_model), jnp.float32),
        }
        params.append(p)

    out = encoder_forward(x, mask_b, params, heads=heads, pre_ln=pre_ln)
    out = jax.block_until_ready(out)

    ref = _ref_forward(x, mask_b, params, heads, pre_ln)
    # Tolerance accounts for the approximate EUP reciprocal in the softmax
    # denominator (pl.reciprocal(approx=True)); genuine bugs produce O(1) errors.
    np.testing.assert_allclose(np.asarray(out), np.asarray(ref), rtol=2e-2, atol=2e-2)

    print("KERNEL_OK")
</pallas_src>

<mosaic_0001>
module attributes {stable_mosaic.version = 11 : i64} {
  func.func @encoder_layer_kernel(%arg0: i32, %arg1: i32, %arg2: memref<16x32xf32, #tpu.memory_space<vmem>>, %arg3: memref<8x8xf32, #tpu.memory_space<vmem>>, %arg4: memref<1x4x32x8xf32, #tpu.memory_space<vmem>>, %arg5: memref<1x4x32x8xf32, #tpu.memory_space<vmem>>, %arg6: memref<1x4x32x8xf32, #tpu.memory_space<vmem>>, %arg7: memref<1x4x8x32xf32, #tpu.memory_space<vmem>>, %arg8: memref<1x1x32xf32, #tpu.memory_space<vmem>>, %arg9: memref<1x1x32xf32, #tpu.memory_space<vmem>>, %arg10: memref<1x32x64xf32, #tpu.memory_space<vmem>>, %arg11: memref<1x1x64xf32, #tpu.memory_space<vmem>>, %arg12: memref<1x64x32xf32, #tpu.memory_space<vmem>>, %arg13: memref<1x1x32xf32, #tpu.memory_space<vmem>>, %arg14: memref<1x1x32xf32, #tpu.memory_space<vmem>>, %arg15: memref<1x1x32xf32, #tpu.memory_space<vmem>>, %arg16: memref<16x32xf32, #tpu.memory_space<vmem>>) attributes {dimension_semantics = [#tpu.dimension_semantics<parallel>, #tpu.dimension_semantics<arbitrary>], iteration_bounds = array<i64: 1, 2>, scalar_prefetch = 0 : i64, scratch_operands = 0 : i64, tpu.core_type = #tpu.core_type<tc>, window_params = [{transform_indices = @transform_0, window_bounds = array<i64: 16, 32>}, {pipeline_mode = #tpu.pipeline_mode<synchronous>, transform_indices = @transform_1, window_bounds = array<i64: 8, 8>}, {transform_indices = @transform_2, window_bounds = array<i64: 1, 4, 32, 8>}, {transform_indices = @transform_3, window_bounds = array<i64: 1, 4, 32, 8>}, {transform_indices = @transform_4, window_bounds = array<i64: 1, 4, 32, 8>}, {transform_indices = @transform_5, window_bounds = array<i64: 1, 4, 8, 32>}, {transform_indices = @transform_6, window_bounds = array<i64: 1, 1, 32>}, {transform_indices = @transform_7, window_bounds = array<i64: 1, 1, 32>}, {transform_indices = @transform_8, window_bounds = array<i64: 1, 32, 64>}, {transform_indices = @transform_9, window_bounds = array<i64: 1, 1, 64>}, {transform_indices = @transform_10, window_bounds = array<i64: 1, 64, 32>}, {transform_indices = @transform_11, window_bounds = array<i64: 1, 1, 32>}, {transform_indices = @transform_12, window_bounds = array<i64: 1, 1, 32>}, {transform_indices = @transform_13, window_bounds = array<i64: 1, 1, 32>}, {transform_indices = @transform_14, window_bounds = array<i64: 16, 32>}]} {
    %c0_i32 = arith.constant 0 : i32
    %0 = arith.cmpi eq, %arg1, %c0_i32 : i32
    %1 = arith.extui %0 : i1 to i32
    %c0_i32_0 = arith.constant 0 : i32
    %2 = arith.cmpi ne, %1, %c0_i32_0 : i32
    scf.if %2 {
      %c0_136 = arith.constant 0 : index
      %c0_137 = arith.constant 0 : index
      %202 = vector.load %arg2[%c0_136, %c0_137] : memref<16x32xf32, #tpu.memory_space<vmem>>, vector<16x32xf32>
      %c0_138 = arith.constant 0 : index
      %c0_139 = arith.constant 0 : index
      %203 = vector.load %arg16[%c0_138, %c0_139] : memref<16x32xf32, #tpu.memory_space<vmem>>, vector<16x32xf32>
      tpu.vector_store %arg16[%c0_138, %c0_139], %202 {strides = array<i32>} : memref<16x32xf32, #tpu.memory_space<vmem>>, vector<16x32xf32>,
    } else {
    }
    %c0 = arith.constant 0 : index
    %c0_1 = arith.constant 0 : index
    %3 = vector.load %arg16[%c0, %c0_1] : memref<16x32xf32, #tpu.memory_space<vmem>>, vector<16x32xf32>
    %c0_2 = arith.constant 0 : index
    %c0_3 = arith.constant 0 : index
    %4 = vector.load %arg3[%c0_2, %c0_3] : memref<8x8xf32, #tpu.memory_space<vmem>>, vector<8x8xf32>
    %5 = vector.shape_cast %4 : vector<8x8xf32> to vector<1x8x8xf32>
    %c0_4 = arith.constant 0 : index
    %c0_5 = arith.constant 0 : index
    %c0_6 = arith.constant 0 : index
    %6 = vector.load %arg8[%c0_4, %c0_5, %c0_6] : memref<1x1x32xf32, #tpu.memory_space<vmem>>, vector<1x1x32xf32>
    %7 = vector.shape_cast %6 : vector<1x1x32xf32> to vector<1x32xf32>
    %c0_7 = arith.constant 0 : index
    %c0_8 = arith.constant 0 : index
    %c0_9 = arith.constant 0 : index
    %8 = vector.load %arg9[%c0_7, %c0_8, %c0_9] : memref<1x1x32xf32, #tpu.memory_space<vmem>>, vector<1x1x32xf32>
    %9 = vector.shape_cast %8 : vector<1x1x32xf32> to vector<1x32xf32>
    %c0_10 = arith.constant 0 : index
    %c0_11 = arith.constant 0 : index
    %c0_12 = arith.constant 0 : index
    %10 = vector.load %arg14[%c0_10, %c0_11, %c0_12] : memref<1x1x32xf32, #tpu.memory_space<vmem>>, vector<1x1x32xf32>
    %11 = vector.shape_cast %10 : vector<1x1x32xf32> to vector<1x32xf32>
    %c0_13 = arith.constant 0 : index
    %c0_14 = arith.constant 0 : index
    %c0_15 = arith.constant 0 : index
    %12 = vector.load %arg15[%c0_13, %c0_14, %c0_15] : memref<1x1x32xf32, #tpu.memory_space<vmem>>, vector<1x1x32xf32>
    %13 = vector.shape_cast %12 : vector<1x1x32xf32> to vector<1x32xf32>
    %cst = arith.constant 0.000000e+00 : f32
    %14 = vector.broadcast %cst : f32 to vector<16x32xf32>
    %c0_16 = arith.constant 0 : index
    %c0_17 = arith.constant 0 : index
    %c0_18 = arith.constant 0 : index
    %c0_19 = arith.constant 0 : index
    %15 = vector.load %arg4[%c0_16, %c0_17, %c0_18, %c0_19] : memref<1x4x32x8xf32, #tpu.memory_space<vmem>>, vector<1x1x32x8xf32>
    %16 = vector.shape_cast %15 : vector<1x1x32x8xf32> to vector<32x8xf32>
    %c0_20 = arith.constant 0 : index
    %c0_21 = arith.constant 0 : index
    %c0_22 = arith.constant 0 : index
    %c0_23 = arith.constant 0 : index
    %17 = vector.load %arg5[%c0_20, %c0_21, %c0_22, %c0_23] : memref<1x4x32x8xf32, #tpu.memory_space<vmem>>, vector<1x1x32x8xf32>
    %18 = vector.shape_cast %17 : vector<1x1x32x8xf32> to vector<32x8xf32>
    %c0_24 = arith.constant 0 : index
    %c0_25 = arith.constant 0 : index
    %c0_26 = arith.constant 0 : index
    %c0_27 = arith.constant 0 : index
    %19 = vector.load %arg6[%c0_24, %c0_25, %c0_26, %c0_27] : memref<1x4x32x8xf32, #tpu.memory_space<vmem>>, vector<1x1x32x8xf32>
    %20 = vector.shape_cast %19 : vector<1x1x32x8xf32> to vector<32x8xf32>
    %c0_28 = arith.constant 0 : index
    %c0_29 = arith.constant 0 : index
    %c0_30 = arith.constant 0 : index
    %c0_31 = arith.constant 0 : index
    %21 = vector.load %arg7[%c0_28, %c0_29, %c0_30, %c0_31] : memref<1x4x8x32xf32, #tpu.memory_space<vmem>>, vector<1x1x8x32xf32>
    %22 = vector.shape_cast %21 : vector<1x1x8x32xf32> to vector<8x32xf32>
    %cst_32 = arith.constant dense<0.000000e+00> : vector<16x8xf32>
    %23 = tpu.matmul %3, %16, %cst_32 {dimension_numbers = #tpu.dot_dimension_numbers<[1], [0], [0], [1], [0, 0, 1, 1], [], []>} : vector<16x32xf32>, vector<32x8xf32>, vector<16x8xf32> -> vector<16x8xf32>
    %cst_33 = arith.constant dense<0.000000e+00> : vector<16x8xf32>
    %24 = tpu.matmul %3, %18, %cst_33 {dimension_numbers = #tpu.dot_dimension_numbers<[1], [0], [0], [1], [0, 0, 1, 1], [], []>} : vector<16x32xf32>, vector<32x8xf32>, vector<16x8xf32> -> vector<16x8xf32>
    %cst_34 = arith.constant dense<0.000000e+00> : vector<16x8xf32>
    %25 = tpu.matmul %3, %20, %cst_34 {dimension_numbers = #tpu.dot_dimension_numbers<[1], [0], [0], [1], [0, 0, 1, 1], [], []>} : vector<16x32xf32>, vector<32x8xf32>, vector<16x8xf32> -> vector<16x8xf32>
    %26 = vector.shape_cast %23 : vector<16x8xf32> to vector<2x8x8xf32>
    %27 = vector.shape_cast %24 : vector<16x8xf32> to vector<2x8x8xf32>
    %28 = vector.shape_cast %25 : vector<16x8xf32> to vector<2x8x8xf32>
    "tpu.trace_start"() <{level = 10 : i32, message = "bqd,bkd->bqk"}> : () -> ()
    %cst_35 = arith.constant dense<0.000000e+00> : vector<2x8x8xf32>
    %29 = tpu.matmul %26, %27, %cst_35 {dimension_numbers = #tpu.dot_dimension_numbers<[2], [2], [1], [1], [0, 0, 0, 1, 1, 1], [0], [0]>} : vector<2x8x8xf32>, vector<2x8x8xf32>, vector<2x8x8xf32> -> vector<2x8x8xf32>
    "tpu.trace_stop"() : () -> ()
    %30 = vector.broadcast %5 : vector<1x8x8xf32> to vector<2x8x8xf32>
    %31 = arith.addf %29, %30 : vector<2x8x8xf32>
    %cst_36 = arith.constant dense<0xFF800000> : vector<2x8xf32>
    %32 = vector.multi_reduction <maximumf>, %31, %cst_36 [2] : vector<2x8x8xf32> to vector<2x8xf32>
    %33 = vector.shape_cast %32 : vector<2x8xf32> to vector<2x8x1xf32>
    %34 = vector.broadcast %33 : vector<2x8x1xf32> to vector<2x8x8xf32>
    %35 = arith.subf %31, %34 : vector<2x8x8xf32>
    %36 = math.exp %35 : vector<2x8x8xf32>
    %cst_37 = arith.constant dense<0.000000e+00> : vector<2x8xf32>
    %37 = vector.multi_reduction <add>, %36, %cst_37 [2] : vector<2x8x8xf32> to vector<2x8xf32>
    %38 = vector.shape_cast %37 : vector<2x8xf32> to vector<2x8x1xf32>
    %39 = tpu.reciprocal %38 {approx = true} : vector<2x8x1xf32> -> vector<2x8x1xf32>
    %40 = vector.broadcast %39 : vector<2x8x1xf32> to vector<2x8x8xf32>
    %41 = arith.mulf %36, %40 : vector<2x8x8xf32>
    "tpu.trace_start"() <{level = 10 : i32, message = "bqk,bkd->bqd"}> : () -> ()
    %cst_38 = arith.constant dense<0.000000e+00> : vector<2x8x8xf32>
    %42 = tpu.matmul %41, %28, %cst_38 {dimension_numbers = #tpu.dot_dimension_numbers<[2], [1], [1], [2], [0, 0, 0, 1, 1, 2], [0], [0]>} : vector<2x8x8xf32>, vector<2x8x8xf32>, vector<2x8x8xf32> -> vector<2x8x8xf32>
    "tpu.trace_stop"() : () -> ()
    %43 = vector.shape_cast %42 : vector<2x8x8xf32> to vector<16x8xf32>
    %cst_39 = arith.constant dense<0.000000e+00> : vector<16x32xf32>
    %44 = tpu.matmul %43, %22, %cst_39 {dimension_numbers = #tpu.dot_dimension_numbers<[1], [0], [0], [1], [0, 0, 1, 1], [], []>} : vector<16x8xf32>, vector<8x32xf32>, vector<16x32xf32> -> vector<16x32xf32>
    %45 = arith.addf %14, %44 : vector<16x32xf32>
    %c0_40 = arith.constant 0 : index
    %c1 = arith.constant 1 : index
    %c0_41 = arith.constant 0 : index
    %c0_42 = arith.constant 0 : index
    %46 = vector.load %arg4[%c0_40, %c1, %c0_41, %c0_42] : memref<1x4x32x8xf32, #tpu.memory_space<vmem>>, vector<1x1x32x8xf32>
    %47 = vector.shape_cast %46 : vector<1x1x32x8xf32> to vector<32x8xf32>
    %c0_43 = arith.constant 0 : index
    %c1_44 = arith.constant 1 : index
    %c0_45 = arith.constant 0 : index
    %c0_46 = arith.constant 0 : index
    %48 = vector.load %arg5[%c0_43, %c1_44, %c0_45, %c0_46] : memref<1x4x32x8xf32, #tpu.memory_space<vmem>>, vector<1x1x32x8xf32>
    %49 = vector.shape_cast %48 : vector<1x1x32x8xf32> to vector<32x8xf32>
    %c0_47 = arith.constant 0 : index
    %c1_48 = arith.constant 1 : index
    %c0_49 = arith.constant 0 : index
    %c0_50 = arith.constant 0 : index
    %50 = vector.load %arg6[%c0_47, %c1_48, %c0_49, %c0_50] : memref<1x4x32x8xf32, #tpu.memory_space<vmem>>, vector<1x1x32x8xf32>
    %51 = vector.shape_cast %50 : vector<1x1x32x8xf32> to vector<32x8xf32>
    %c0_51 = arith.constant 0 : index
    %c1_52 = arith.constant 1 : index
    %c0_53 = arith.constant 0 : index
    %c0_54 = arith.constant 0 : index
    %52 = vector.load %arg7[%c0_51, %c1_52, %c0_53, %c0_54] : memref<1x4x8x32xf32, #tpu.memory_space<vmem>>, vector<1x1x8x32xf32>
    %53 = vector.shape_cast %52 : vector<1x1x8x32xf32> to vector<8x32xf32>
    %cst_55 = arith.constant dense<0.000000e+00> : vector<16x8xf32>
    %54 = tpu.matmul %3, %47, %cst_55 {dimension_numbers = #tpu.dot_dimension_numbers<[1], [0], [0], [1], [0, 0, 1, 1], [], []>} : vector<16x32xf32>, vector<32x8xf32>, vector<16x8xf32> -> vector<16x8xf32>
    %cst_56 = arith.constant dense<0.000000e+00> : vector<16x8xf32>
    %55 = tpu.matmul %3, %49, %cst_56 {dimension_numbers = #tpu.dot_dimension_numbers<[1], [0], [0], [1], [0, 0, 1, 1], [], []>} : vector<16x32xf32>, vector<32x8xf32>, vector<16x8xf32> -> vector<16x8xf32>
    %cst_57 = arith.constant dense<0.000000e+00> : vector<16x8xf32>
    %56 = tpu.matmul %3, %51, %cst_57 {dimension_numbers = #tpu.dot_dimension_numbers<[1], [0], [0], [1], [0, 0, 1, 1], [], []>} : vector<16x32xf32>, vector<32x8xf32>, vector<16x8xf32> -> vector<16x8xf32>
    %57 = vector.shape_cast %54 : vector<16x8xf32> to vector<2x8x8xf32>
    %58 = vector.shape_cast %55 : vector<16x8xf32> to vector<2x8x8xf32>
    %59 = vector.shape_cast %56 : vector<16x8xf32> to vector<2x8x8xf32>
    "tpu.trace_start"() <{level = 10 : i32, message = "bqd,bkd->bqk"}> : () -> ()
    %cst_58 = arith.constant dense<0.000000e+00> : vector<2x8x8xf32>
    %60 = tpu.matmul %57, %58, %cst_58 {dimension_numbers = #tpu.dot_dimension_numbers<[2], [2], [1], [1], [0, 0, 0, 1, 1, 1], [0], [0]>} : vector<2x8x8xf32>, vector<2x8x8xf32>, vector<2x8x8xf32> -> vector<2x8x8xf32>
    "tpu.trace_stop"() : () -> ()
    %61 = vector.broadcast %5 : vector<1x8x8xf32> to vector<2x8x8xf32>
    %62 = arith.addf %60, %61 : vector<2x8x8xf32>
    %cst_59 = arith.constant dense<0xFF800000> : vector<2x8xf32>
    %63 = vector.multi_reduction <maximumf>, %62, %cst_59 [2] : vector<2x8x8xf32> to vector<2x8xf32>
    %64 = vector.shape_cast %63 : vector<2x8xf32> to vector<2x8x1xf32>
    %65 = vector.broadcast %64 : vector<2x8x1xf32> to vector<2x8x8xf32>
    %66 = arith.subf %62, %65 : vector<2x8x8xf32>
    %67 = math.exp %66 : vector<2x8x8xf32>
    %cst_60 = arith.constant dense<0.000000e+00> : vector<2x8xf32>
    %68 = vector.multi_reduction <add>, %67, %cst_60 [2] : vector<2x8x8xf32> to vector<2x8xf32>
    %69 = vector.shape_cast %68 : vector<2x8xf32> to vector<2x8x1xf32>
    %70 = tpu.reciprocal %69 {approx = true} : vector<2x8x1xf32> -> vector<2x8x1xf32>
    %71 = vector.broadcast %70 : vector<2x8x1xf32> to vector<2x8x8xf32>
    %72 = arith.mulf %67, %71 : vector<2x8x8xf32>
    "tpu.trace_start"() <{level = 10 : i32, message = "bqk,bkd->bqd"}> : () -> ()
    %cst_61 = arith.constant dense<0.000000e+00> : vector<2x8x8xf32>
    %73 = tpu.matmul %72, %59, %cst_61 {dimension_numbers = #tpu.dot_dimension_numbers<[2], [1], [1], [2], [0, 0, 0, 1, 1, 2], [0], [0]>} : vector<2x8x8xf32>, vector<2x8x8xf32>, vector<2x8x8xf32> -> vector<2x8x8xf32>
    "tpu.trace_stop"() : () -> ()
    %74 = vector.shape_cast %73 : vector<2x8x8xf32> to vector<16x8xf32>
    %cst_62 = arith.constant dense<0.000000e+00> : vector<16x32xf32>
    %75 = tpu.matmul %74, %53, %cst_62 {dimension_numbers = #tpu.dot_dimension_numbers<[1], [0], [0], [1], [0, 0, 1, 1], [], []>} : vector<16x8xf32>, vector<8x32xf32>, vector<16x32xf32> -> vector<16x32xf32>
    %76 = arith.addf %45, %75 : vector<16x32xf32>
    %c0_63 = arith.constant 0 : index
    %c2 = arith.constant 2 : index
    %c0_64 = arith.constant 0 : index
    %c0_65 = arith.constant 0 : index
    %77 = vector.load %arg4[%c0_63, %c2, %c0_64, %c0_65] : memref<1x4x32x8xf32, #tpu.memory_space<vmem>>, vector<1x1x32x8xf32>
    %78 = vector.shape_cast %77 : vector<1x1x32x8xf32> to vector<32x8xf32>
    %c0_66 = arith.constant 0 : index
    %c2_67 = arith.constant 2 : index
    %c0_68 = arith.constant 0 : index
    %c0_69 = arith.constant 0 : index
    %79 = vector.load %arg5[%c0_66, %c2_67, %c0_68, %c0_69] : memref<1x4x32x8xf32, #tpu.memory_space<vmem>>, vector<1x1x32x8xf32>
    %80 = vector.shape_cast %79 : vector<1x1x32x8xf32> to vector<32x8xf32>
    %c0_70 = arith.constant 0 : index
    %c2_71 = arith.constant 2 : index
    %c0_72 = arith.constant 0 : index
    %c0_73 = arith.constant 0 : index
    %81 = vector.load %arg6[%c0_70, %c2_71, %c0_72, %c0_73] : memref<1x4x32x8xf32, #tpu.memory_space<vmem>>, vector<1x1x32x8xf32>
    %82 = vector.shape_cast %81 : vector<1x1x32x8xf32> to vector<32x8xf32>
    %c0_74 = arith.constant 0 : index
    %c2_75 = arith.constant 2 : index
    %c0_76 = arith.constant 0 : index
    %c0_77 = arith.constant 0 : index
    %83 = vector.load %arg7[%c0_74, %c2_75, %c0_76, %c0_77] : memref<1x4x8x32xf32, #tpu.memory_space<vmem>>, vector<1x1x8x32xf32>
    %84 = vector.shape_cast %83 : vector<1x1x8x32xf32> to vector<8x32xf32>
    %cst_78 = arith.constant dense<0.000000e+00> : vector<16x8xf32>
    %85 = tpu.matmul %3, %78, %cst_78 {dimension_numbers = #tpu.dot_dimension_numbers<[1], [0], [0], [1], [0, 0, 1, 1], [], []>} : vector<16x32xf32>, vector<32x8xf32>, vector<16x8xf32> -> vector<16x8xf32>
    %cst_79 = arith.constant dense<0.000000e+00> : vector<16x8xf32>
    %86 = tpu.matmul %3, %80, %cst_79 {dimension_numbers = #tpu.dot_dimension_numbers<[1], [0], [0], [1], [0, 0, 1, 1], [], []>} : vector<16x32xf32>, vector<32x8xf32>, vector<16x8xf32> -> vector<16x8xf32>
    %cst_80 = arith.constant dense<0.000000e+00> : vector<16x8xf32>
    %87 = tpu.matmul %3, %82, %cst_80 {dimension_numbers = #tpu.dot_dimension_numbers<[1], [0], [0], [1], [0, 0, 1, 1], [], []>} : vector<16x32xf32>, vector<32x8xf32>, vector<16x8xf32> -> vector<16x8xf32>
    %88 = vector.shape_cast %85 : vector<16x8xf32> to vector<2x8x8xf32>
    %89 = vector.shape_cast %86 : vector<16x8xf32> to vector<2x8x8xf32>
    %90 = vector.shape_cast %87 : vector<16x8xf32> to vector<2x8x8xf32>
    "tpu.trace_start"() <{level = 10 : i32, message = "bqd,bkd->bqk"}> : () -> ()
    %cst_81 = arith.constant dense<0.000000e+00> : vector<2x8x8xf32>
    %91 = tpu.matmul %88, %89, %cst_81 {dimension_numbers = #tpu.dot_dimension_numbers<[2], [2], [1], [1], [0, 0, 0, 1, 1, 1], [0], [0]>} : vector<2x8x8xf32>, vector<2x8x8xf32>, vector<2x8x8xf32> -> vector<2x8x8xf32>
    "tpu.trace_stop"() : () -> ()
    %92 = vector.broadcast %5 : vector<1x8x8xf32> to vector<2x8x8xf32>
    %93 = arith.addf %91, %92 : vector<2x8x8xf32>
    %cst_82 = arith.constant dense<0xFF800000> : vector<2x8xf32>
    %94 = vector.multi_reduction <maximumf>, %93, %cst_82 [2] : vector<2x8x8xf32> to vector<2x8xf32>
    %95 = vector.shape_cast %94 : vector<2x8xf32> to vector<2x8x1xf32>
    %96 = vector.broadcast %95 : vector<2x8x1xf32> to vector<2x8x8xf32>
    %97 = arith.subf %93, %96 : vector<2x8x8xf32>
    %98 = math.exp %97 : vector<2x8x8xf32>
    %cst_83 = arith.constant dense<0.000000e+00> : vector<2x8xf32>
    %99 = vector.multi_reduction <add>, %98, %cst_83 [2] : vector<2x8x8xf32> to vector<2x8xf32>
    %100 = vector.shape_cast %99 : vector<2x8xf32> to vector<2x8x1xf32>
    %101 = tpu.reciprocal %100 {approx = true} : vector<2x8x1xf32> -> vector<2x8x1xf32>
    %102 = vector.broadcast %101 : vector<2x8x1xf32> to vector<2x8x8xf32>
    %103 = arith.mulf %98, %102 : vector<2x8x8xf32>
    "tpu.trace_start"() <{level = 10 : i32, message = "bqk,bkd->bqd"}> : () -> ()
    %cst_84 = arith.constant dense<0.000000e+00> : vector<2x8x8xf32>
    %104 = tpu.matmul %103, %90, %cst_84 {dimension_numbers = #tpu.dot_dimension_numbers<[2], [1], [1], [2], [0, 0, 0, 1, 1, 2], [0], [0]>} : vector<2x8x8xf32>, vector<2x8x8xf32>, vector<2x8x8xf32> -> vector<2x8x8xf32>
    "tpu.trace_stop"() : () -> ()
    %105 = vector.shape_cast %104 : vector<2x8x8xf32> to vector<16x8xf32>
    %cst_85 = arith.constant dense<0.000000e+00> : vector<16x32xf32>
    %106 = tpu.matmul %105, %84, %cst_85 {dimension_numbers = #tpu.dot_dimension_numbers<[1], [0], [0], [1], [0, 0, 1, 1], [], []>} : vector<16x8xf32>, vector<8x32xf32>, vector<16x32xf32> -> vector<16x32xf32>
    %107 = arith.addf %76, %106 : vector<16x32xf32>
    %c0_86 = arith.constant 0 : index
    %c3 = arith.constant 3 : index
    %c0_87 = arith.constant 0 : index
    %c0_88 = arith.constant 0 : index
    %108 = vector.load %arg4[%c0_86, %c3, %c0_87, %c0_88] : memref<1x4x32x8xf32, #tpu.memory_space<vmem>>, vector<1x1x32x8xf32>
    %109 = vector.shape_cast %108 : vector<1x1x32x8xf32> to vector<32x8xf32>
    %c0_89 = arith.constant 0 : index
    %c3_90 = arith.constant 3 : index
    %c0_91 = arith.constant 0 : index
    %c0_92 = arith.constant 0 : index
    %110 = vector.load %arg5[%c0_89, %c3_90, %c0_91, %c0_92] : memref<1x4x32x8xf32, #tpu.memory_space<vmem>>, vector<1x1x32x8xf32>
    %111 = vector.shape_cast %110 : vector<1x1x32x8xf32> to vector<32x8xf32>
    %c0_93 = arith.constant 0 : index
    %c3_94 = arith.constant 3 : index
    %c0_95 = arith.constant 0 : index
    %c0_96 = arith.constant 0 : index
    %112 = vector.load %arg6[%c0_93, %c3_94, %c0_95, %c0_96] : memref<1x4x32x8xf32, #tpu.memory_space<vmem>>, vector<1x1x32x8xf32>
    %113 = vector.shape_cast %112 : vector<1x1x32x8xf32> to vector<32x8xf32>
    %c0_97 = arith.constant 0 : index
    %c3_98 = arith.constant 3 : index
    %c0_99 = arith.constant 0 : index
    %c0_100 = arith.constant 0 : index
    %114 = vector.load %arg7[%c0_97, %c3_98, %c0_99, %c0_100] : memref<1x4x8x32xf32, #tpu.memory_space<vmem>>, vector<1x1x8x32xf32>
    %115 = vector.shape_cast %114 : vector<1x1x8x32xf32> to vector<8x32xf32>
    %cst_101 = arith.constant dense<0.000000e+00> : vector<16x8xf32>
    %116 = tpu.matmul %3, %109, %cst_101 {dimension_numbers = #tpu.dot_dimension_numbers<[1], [0], [0], [1], [0, 0, 1, 1], [], []>} : vector<16x32xf32>, vector<32x8xf32>, vector<16x8xf32> -> vector<16x8xf32>
    %cst_102 = arith.constant dense<0.000000e+00> : vector<16x8xf32>
    %117 = tpu.matmul %3, %111, %cst_102 {dimension_numbers = #tpu.dot_dimension_numbers<[1], [0], [0], [1], [0, 0, 1, 1], [], []>} : vector<16x32xf32>, vector<32x8xf32>, vector<16x8xf32> -> vector<16x8xf32>
    %cst_103 = arith.constant dense<0.000000e+00> : vector<16x8xf32>
    %118 = tpu.matmul %3, %113, %cst_103 {dimension_numbers = #tpu.dot_dimension_numbers<[1], [0], [0], [1], [0, 0, 1, 1], [], []>} : vector<16x32xf32>, vector<32x8xf32>, vector<16x8xf32> -> vector<16x8xf32>
    %119 = vector.shape_cast %116 : vector<16x8xf32> to vector<2x8x8xf32>
    %120 = vector.shape_cast %117 : vector<16x8xf32> to vector<2x8x8xf32>
    %121 = vector.shape_cast %118 : vector<16x8xf32> to vector<2x8x8xf32>
    "tpu.trace_start"() <{level = 10 : i32, message = "bqd,bkd->bqk"}> : () -> ()
    %cst_104 = arith.constant dense<0.000000e+00> : vector<2x8x8xf32>
    %122 = tpu.matmul %119, %120, %cst_104 {dimension_numbers = #tpu.dot_dimension_numbers<[2], [2], [1], [1], [0, 0, 0, 1, 1, 1], [0], [0]>} : vector<2x8x8xf32>, vector<2x8x8xf32>, vector<2x8x8xf32> -> vector<2x8x8xf32>
    "tpu.trace_stop"() : () -> ()
    %123 = vector.broadcast %5 : vector<1x8x8xf32> to vector<2x8x8xf32>
    %124 = arith.addf %122, %123 : vector<2x8x8xf32>
    %cst_105 = arith.constant dense<0xFF800000> : vector<2x8xf32>
    %125 = vector.multi_reduction <maximumf>, %124, %cst_105 [2] : vector<2x8x8xf32> to vector<2x8xf32>
    %126 = vector.shape_cast %125 : vector<2x8xf32> to vector<2x8x1xf32>
    %127 = vector.broadcast %126 : vector<2x8x1xf32> to vector<2x8x8xf32>
    %128 = arith.subf %124, %127 : vector<2x8x8xf32>
    %129 = math.exp %128 : vector<2x8x8xf32>
    %cst_106 = arith.constant dense<0.000000e+00> : vector<2x8xf32>
    %130 = vector.multi_reduction <add>, %129, %cst_106 [2] : vector<2x8x8xf32> to vector<2x8xf32>
    %131 = vector.shape_cast %130 : vector<2x8xf32> to vector<2x8x1xf32>
    %132 = tpu.reciprocal %131 {approx = true} : vector<2x8x1xf32> -> vector<2x8x1xf32>
    %133 = vector.broadcast %132 : vector<2x8x1xf32> to vector<2x8x8xf32>
    %134 = arith.mulf %129, %133 : vector<2x8x8xf32>
    "tpu.trace_start"() <{level = 10 : i32, message = "bqk,bkd->bqd"}> : () -> ()
    %cst_107 = arith.constant dense<0.000000e+00> : vector<2x8x8xf32>
    %135 = tpu.matmul %134, %121, %cst_107 {dimension_numbers = #tpu.dot_dimension_numbers<[2], [1], [1], [2], [0, 0, 0, 1, 1, 2], [0], [0]>} : vector<2x8x8xf32>, vector<2x8x8xf32>, vector<2x8x8xf32> -> vector<2x8x8xf32>
    "tpu.trace_stop"() : () -> ()
    %136 = vector.shape_cast %135 : vector<2x8x8xf32> to vector<16x8xf32>
    %cst_108 = arith.constant dense<0.000000e+00> : vector<16x32xf32>
    %137 = tpu.matmul %136, %115, %cst_108 {dimension_numbers = #tpu.dot_dimension_numbers<[1], [0], [0], [1], [0, 0, 1, 1], [], []>} : vector<16x8xf32>, vector<8x32xf32>, vector<16x32xf32> -> vector<16x32xf32>
    %138 = arith.addf %107, %137 : vector<16x32xf32>
    %139 = arith.addf %138, %3 : vector<16x32xf32>
    %cst_109 = arith.constant dense<0.000000e+00> : vector<16xf32>
    %140 = vector.multi_reduction <add>, %139, %cst_109 [1] : vector<16x32xf32> to vector<16xf32>
    %141 = vector.shape_cast %140 : vector<16xf32> to vector<16x1xf32>
    %cst_110 = arith.constant 3.200000e+01 : f32
    %142 = vector.broadcast %cst_110 : f32 to vector<16x1xf32>
    %143 = arith.divf %141, %142 : vector<16x1xf32>
    %144 = vector.broadcast %143 : vector<16x1xf32> to vector<16x32xf32>
    %145 = arith.subf %139, %144 : vector<16x32xf32>
    %146 = arith.mulf %145, %145 : vector<16x32xf32>
    %cst_111 = arith.constant dense<0.000000e+00> : vector<16xf32>
    %147 = vector.multi_reduction <add>, %146, %cst_111 [1] : vector<16x32xf32> to vector<16xf32>
    %148 = vector.shape_cast %147 : vector<16xf32> to vector<16x1xf32>
    %cst_112 = arith.constant 3.200000e+01 : f32
    %149 = vector.broadcast %cst_112 : f32 to vector<16x1xf32>
    %150 = arith.divf %148, %149 : vector<16x1xf32>
    %151 = vector.broadcast %143 : vector<16x1xf32> to vector<16x32xf32>
    %152 = arith.subf %139, %151 : vector<16x32xf32>
    %cst_113 = arith.constant 9.99999974E-6 : f32
    %153 = vector.broadcast %cst_113 : f32 to vector<16x1xf32>
    %154 = arith.addf %150, %153 : vector<16x1xf32>
    %155 = math.rsqrt %154 : vector<16x1xf32>
    %156 = vector.broadcast %155 : vector<16x1xf32> to vector<16x32xf32>
    %157 = arith.mulf %152, %156 : vector<16x32xf32>
    %158 = vector.broadcast %7 : vector<1x32xf32> to vector<16x32xf32>
    %159 = arith.mulf %157, %158 : vector<16x32xf32>
    %160 = vector.broadcast %9 : vector<1x32xf32> to vector<16x32xf32>
    %161 = arith.addf %159, %160 : vector<16x32xf32>
    %c0_114 = arith.constant 0 : index
    %c0_115 = arith.constant 0 : index
    %c0_116 = arith.constant 0 : index
    %162 = vector.load %arg10[%c0_114, %c0_115, %c0_116] : memref<1x32x64xf32, #tpu.memory_space<vmem>>, vector<1x32x64xf32>
    %163 = vector.shape_cast %162 : vector<1x32x64xf32> to vector<32x64xf32>
    %cst_117 = arith.constant dense<0.000000e+00> : vector<16x64xf32>
    %164 = tpu.matmul %161, %163, %cst_117 {dimension_numbers = #tpu.dot_dimension_numbers<[1], [0], [0], [1], [0, 0, 1, 1], [], []>} : vector<16x32xf32>, vector<32x64xf32>, vector<16x64xf32> -> vector<16x64xf32>
    %c0_118 = arith.constant 0 : index
    %c0_119 = arith.constant 0 : index
    %c0_120 = arith.constant 0 : index
    %165 = vector.load %arg11[%c0_118, %c0_119, %c0_120] : memref<1x1x64xf32, #tpu.memory_space<vmem>>, vector<1x1x64xf32>
    %166 = vector.shape_cast %165 : vector<1x1x64xf32> to vector<1x64xf32>
    %167 = vector.broadcast %166 : vector<1x64xf32> to vector<16x64xf32>
    %168 = arith.addf %164, %167 : vector<16x64xf32>
    %c0_121 = arith.constant 0 : index
    %c0_122 = arith.constant 0 : index
    %c0_123 = arith.constant 0 : index
    %169 = vector.load %arg12[%c0_121, %c0_122, %c0_123] : memref<1x64x32xf32, #tpu.memory_space<vmem>>, vector<1x64x32xf32>
    %170 = vector.shape_cast %169 : vector<1x64x32xf32> to vector<64x32xf32>
    %cst_124 = arith.constant dense<0.000000e+00> : vector<16x32xf32>
    %171 = tpu.matmul %168, %170, %cst_124 {dimension_numbers = #tpu.dot_dimension_numbers<[1], [0], [0], [1], [0, 0, 1, 1], [], []>} : vector<16x64xf32>, vector<64x32xf32>, vector<16x32xf32> -> vector<16x32xf32>
    %c0_125 = arith.constant 0 : index
    %c0_126 = arith.constant 0 : index
    %c0_127 = arith.constant 0 : index
    %172 = vector.load %arg13[%c0_125, %c0_126, %c0_127] : memref<1x1x32xf32, #tpu.memory_space<vmem>>, vector<1x1x32xf32>
    %173 = vector.shape_cast %172 : vector<1x1x32xf32> to vector<1x32xf32>
    %174 = vector.broadcast %173 : vector<1x32xf32> to vector<16x32xf32>
    %175 = arith.addf %171, %174 : vector<16x32xf32>
    %cst_128 = arith.constant 0.000000e+00 : f32
    %176 = vector.broadcast %cst_128 : f32 to vector<16x32xf32>
    %177 = arith.maximumf %175, %176 : vector<16x32xf32>
    %178 = arith.addf %177, %161 : vector<16x32xf32>
    %cst_129 = arith.constant dense<0.000000e+00> : vector<16xf32>
    %179 = vector.multi_reduction <add>, %178, %cst_129 [1] : vector<16x32xf32> to vector<16xf32>
    %180 = vector.shape_cast %179 : vector<16xf32> to vector<16x1xf32>
    %cst_130 = arith.constant 3.200000e+01 : f32
    %181 = vector.broadcast %cst_130 : f32 to vector<16x1xf32>
    %182 = arith.divf %180, %181 : vector<16x1xf32>
    %183 = vector.broadcast %182 : vector<16x1xf32> to vector<16x32xf32>
    %184 = arith.subf %178, %183 : vector<16x32xf32>
    %185 = arith.mulf %184, %184 : vector<16x32xf32>
    %cst_131 = arith.constant dense<0.000000e+00> : vector<16xf32>
    %186 = vector.multi_reduction <add>, %185, %cst_131 [1] : vector<16x32xf32> to vector<16xf32>
    %187 = vector.shape_cast %186 : vector<16xf32> to vector<16x1xf32>
    %cst_132 = arith.constant 3.200000e+01 : f32
    %188 = vector.broadcast %cst_132 : f32 to vector<16x1xf32>
    %189 = arith.divf %187, %188 : vector<16x1xf32>
    %190 = vector.broadcast %182 : vector<16x1xf32> to vector<16x32xf32>
    %191 = arith.subf %178, %190 : vector<16x32xf32>
    %cst_133 = arith.constant 9.99999974E-6 : f32
    %192 = vector.broadcast %cst_133 : f32 to vector<16x1xf32>
    %193 = arith.addf %189, %192 : vector<16x1xf32>
    %194 = math.rsqrt %193 : vector<16x1xf32>
    %195 = vector.broadcast %194 : vector<16x1xf32> to vector<16x32xf32>
    %196 = arith.mulf %191, %195 : vector<16x32xf32>
    %197 = vector.broadcast %11 : vector<1x32xf32> to vector<16x32xf32>
    %198 = arith.mulf %196, %197 : vector<16x32xf32>
    %199 = vector.broadcast %13 : vector<1x32xf32> to vector<16x32xf32>
    %200 = arith.addf %198, %199 : vector<16x32xf32>
    %c0_134 = arith.constant 0 : index
    %c0_135 = arith.constant 0 : index
    %201 = vector.load %arg16[%c0_134, %c0_135] : memref<16x32xf32, #tpu.memory_space<vmem>>, vector<16x32xf32>
    tpu.vector_store %arg16[%c0_134, %c0_135], %200 {strides = array<i32>} : memref<16x32xf32, #tpu.memory_space<vmem>>, vector<16x32xf32>,
    return
  }
  func.func @transform_0(%arg0: i32, %arg1: i32) -> (i32, i32) {
    %c0_i32 = arith.constant 0 : i32
    %c0_i32_0 = arith.constant 0 : i32
    return %arg0, %c0_i32 : i32, i32
  }
  func.func @transform_1(%arg0: i32, %arg1: i32) -> (i32, i32) {
    %c0_i32 = arith.constant 0 : i32
    %c0_i32_0 = arith.constant 0 : i32
    %c0_i32_1 = arith.constant 0 : i32
    return %c0_i32, %c0_i32_0 : i32, i32
  }
  func.func @transform_2(%arg0: i32, %arg1: i32) -> (i32, i32, i32, i32) {
    %c0_i32 = arith.constant 0 : i32
    %c0_i32_0 = arith.constant 0 : i32
    %c0_i32_1 = arith.constant 0 : i32
    %c0_i32_2 = arith.constant 0 : i32
    return %arg1, %c0_i32, %c0_i32_0, %c0_i32_1 : i32, i32, i32, i32
  }
  func.func @transform_3(%arg0: i32, %arg1: i32) -> (i32, i32, i32, i32) {
    %c0_i32 = arith.constant 0 : i32
    %c0_i32_0 = arith.constant 0 : i32
    %c0_i32_1 = arith.constant 0 : i32
    %c0_i32_2 = arith.constant 0 : i32
    return %arg1, %c0_i32, %c0_i32_0, %c0_i32_1 : i32, i32, i32, i32
  }
  func.func @transform_4(%arg0: i32, %arg1: i32) -> (i32, i32, i32, i32) {
    %c0_i32 = arith.constant 0 : i32
    %c0_i32_0 = arith.constant 0 : i32
    %c0_i32_1 = arith.constant 0 : i32
    %c0_i32_2 = arith.constant 0 : i32
    return %arg1, %c0_i32, %c0_i32_0, %c0_i32_1 : i32, i32, i32, i32
  }
  func.func @transform_5(%arg0: i32, %arg1: i32) -> (i32, i32, i32, i32) {
    %c0_i32 = arith.constant 0 : i32
    %c0_i32_0 = arith.constant 0 : i32
    %c0_i32_1 = arith.constant 0 : i32
    %c0_i32_2 = arith.constant 0 : i32
    return %arg1, %c0_i32, %c0_i32_0, %c0_i32_1 : i32, i32, i32, i32
  }
  func.func @transform_6(%arg0: i32, %arg1: i32) -> (i32, i32, i32) {
    %c0_i32 = arith.constant 0 : i32
    %c0_i32_0 = arith.constant 0 : i32
    %c0_i32_1 = arith.constant 0 : i32
    return %arg1, %c0_i32, %c0_i32_0 : i32, i32, i32
  }
  func.func @transform_7(%arg0: i32, %arg1: i32) -> (i32, i32, i32) {
    %c0_i32 = arith.constant 0 : i32
    %c0_i32_0 = arith.constant 0 : i32
    %c0_i32_1 = arith.constant 0 : i32
    return %arg1, %c0_i32, %c0_i32_0 : i32, i32, i32
  }
  func.func @transform_8(%arg0: i32, %arg1: i32) -> (i32, i32, i32) {
    %c0_i32 = arith.constant 0 : i32
    %c0_i32_0 = arith.constant 0 : i32
    %c0_i32_1 = arith.constant 0 : i32
    return %arg1, %c0_i32, %c0_i32_0 : i32, i32, i32
  }
  func.func @transform_9(%arg0: i32, %arg1: i32) -> (i32, i32, i32) {
    %c0_i32 = arith.constant 0 : i32
    %c0_i32_0 = arith.constant 0 : i32
    %c0_i32_1 = arith.constant 0 : i32
    return %arg1, %c0_i32, %c0_i32_0 : i32, i32, i32
  }
  func.func @transform_10(%arg0: i32, %arg1: i32) -> (i32, i32, i32) {
    %c0_i32 = arith.constant 0 : i32
    %c0_i32_0 = arith.constant 0 : i32
    %c0_i32_1 = arith.constant 0 : i32
    return %arg1, %c0_i32, %c0_i32_0 : i32, i32, i32
  }
  func.func @transform_11(%arg0: i32, %arg1: i32) -> (i32, i32, i32) {
    %c0_i32 = arith.constant 0 : i32
    %c0_i32_0 = arith.constant 0 : i32
    %c0_i32_1 = arith.constant 0 : i32
    return %arg1, %c0_i32, %c0_i32_0 : i32, i32, i32
  }
  func.func @transform_12(%arg0: i32, %arg1: i32) -> (i32, i32, i32) {
    %c0_i32 = arith.constant 0 : i32
    %c0_i32_0 = arith.constant 0 : i32
    %c0_i32_1 = arith.constant 0 : i32
    return %arg1, %c0_i32, %c0_i32_0 : i32, i32, i32
  }
  func.func @transform_13(%arg0: i32, %arg1: i32) -> (i32, i32, i32) {
    %c0_i32 = arith.constant 0 : i32
    %c0_i32_0 = arith.constant 0 : i32
    %c0_i32_1 = arith.constant 0 : i32
    return %arg1, %c0_i32, %c0_i32_0 : i32, i32, i32
  }
  func.func @transform_14(%arg0: i32, %arg1: i32) -> (i32, i32) {
    %c0_i32 = arith.constant 0 : i32
    %c0_i32_0 = arith.constant 0 : i32
    return %arg0, %c0_i32 : i32, i32
  }
}

</mosaic_0001>

<llo_original>
// kernel: tpu_custom_call.1
$region0: #{tpu_custom_call.1}
  #allocation0 [shape = 'u32[]', space=smem, size = 0x4, offset = 0x4, fixed_abs, tag = 'smem constant byte address 0x4 - core index']
  #allocation1 [shape = 'u32[72,128]{1,0:T(1,128)}', space=vmem, size = 0x9000, scoped, tag = 'internal scratch']
  %s0 = inlined_call_operand.vmem [shape: f32[16,32], index: 0, kind: input, shape index: {}]
  %s1 = inlined_call_operand.vmem [shape: f32[8,8], index: 1, kind: input, shape index: {}]
  %s2 = inlined_call_operand.vmem [shape: f32[2,4,32,8], index: 2, kind: input, shape index: {}]
  %s3 = inlined_call_operand.vmem [shape: f32[2,4,32,8], index: 3, kind: input, shape index: {}]
  %s4 = inlined_call_operand.vmem [shape: f32[2,4,32,8], index: 4, kind: input, shape index: {}]
  %s5 = inlined_call_operand.vmem [shape: f32[2,4,8,32], index: 5, kind: input, shape index: {}]
  %s6 = inlined_call_operand.vmem [shape: f32[2,1,32], index: 6, kind: input, shape index: {}]
  %s7 = inlined_call_operand.vmem [shape: f32[2,1,32], index: 7, kind: input, shape index: {}]
  %s8 = inlined_call_operand.vmem [shape: f32[2,32,64], index: 8, kind: input, shape index: {}]
  %s9 = inlined_call_operand.vmem [shape: f32[2,1,64], index: 9, kind: input, shape index: {}]
  %s10 = inlined_call_operand.vmem [shape: f32[2,64,32], index: 10, kind: input, shape index: {}]
  %s11 = inlined_call_operand.vmem [shape: f32[2,1,32], index: 11, kind: input, shape index: {}]
  %s12 = inlined_call_operand.vmem [shape: f32[2,1,32], index: 12, kind: input, shape index: {}]
  %s13 = inlined_call_operand.vmem [shape: f32[2,1,32], index: 13, kind: input, shape index: {}]
  %s14 = inlined_call_operand.hbm [shape: f32[16,32], index: 14, kind: output, shape index: {}]
  %s15 = sld [smem:[#allocation0]]
  $region93: #{tpu_custom_call.1} parent=0
    _
  %s17 = ssub.s32 1, %s15
  %s18 = scalar_select 0, %s17, %s15
  $region1: #{tpu_custom_call.1} parent=0
    #allocation2 [shape = 'u8[8192]{0}', space=vmem, size = 0x2000, scoped, tag = 'output window, operand 0, single buffered']
    #allocation3 [shape = 's32[2]{0}', space=sflag, size = 0x8, scoped, tag = 'scoped memory for tpu_custom_call.1']
    %19 = vsyncpa [#allocation3], 0
    loop: start=0, step=1, limit=4
    $region2: #{tpu_custom_call.1} parent=1 // loop_pre_header
      _
    $region3: #{tpu_custom_call.1} parent=1 // loop_header
      %s21 = sphi 0, %s25
      %p22 = scmp.ge.s32.totalorder %s21, 4
      %s28 = sphi 0, %s40
      %s29 = sphi 0, %s36
      %s30 = sphi 0, %s28
      %s31 = sphi 0, %s29
      %s32 = sphi 0, %s30
      %s33 = sphi 0, %s31
      %s43 = sphi 0, %s45
      %s46 = sphi 0, %s43
      %s47 = sphi 0, %s46
      %s63 = sphi 0, %s47
      %s67 = sphi 0, %s67
      %s69 = sphi 0, %s67
      %s70 = sphi 0, %s69
      %s84 = sphi 0, %s70
      %s90 = sphi 0, %s92
      %s93 = sphi 0, %s90
      %s94 = sphi 0, %s93
      %s110 = sphi 0, %s94
      %s116 = sphi 0, %s118
      %s119 = sphi 0, %s116
      %s120 = sphi 0, %s119
      %s136 = sphi 0, %s120
      %s142 = sphi 0, %s144
      %s145 = sphi 0, %s142
      %s146 = sphi 0, %s145
      %s162 = sphi 0, %s146
      %s168 = sphi 0, %s170
      %s171 = sphi 0, %s168
      %s172 = sphi 0, %s171
      %s188 = sphi 0, %s172
      %s194 = sphi 0, %s196
      %s197 = sphi 0, %s194
      %s198 = sphi 0, %s197
      %s214 = sphi 0, %s198
      %s220 = sphi 0, %s222
      %s223 = sphi 0, %s220
      %s224 = sphi 0, %s223
      %s240 = sphi 0, %s224
      %s246 = sphi 0, %s248
      %s249 = sphi 0, %s246
      %s250 = sphi 0, %s249
      %s266 = sphi 0, %s250
      %s272 = sphi 0, %s274
      %s275 = sphi 0, %s272
      %s276 = sphi 0, %s275
      %s292 = sphi 0, %s276
      %s298 = sphi 0, %s300
      %s301 = sphi 0, %s298
      %s302 = sphi 0, %s301
      %s318 = sphi 0, %s302
      %s324 = sphi 0, %s326
      %s327 = sphi 0, %s324
      %s328 = sphi 0, %s327
      %s344 = sphi 0, %s328
      %s350 = sphi 0, %s352
      %s353 = sphi 0, %s350
      %s354 = sphi 0, %s353
      %s370 = sphi 0, %s354
      %s376 = sphi 0, %s378
      %s379 = sphi 0, %s376
      %s380 = sphi 0, %s379
      %s396 = sphi 0, %s380
      %s402 = sphi 0, %s404
      %s405 = sphi 0, %s402
      %s406 = sphi 0, %s405
      %s422 = sphi 0, %s406
    $region4: #{tpu_custom_call.1} parent=1 // loop_header_branch
      %24 = sbr.rel (%p22) target = $region8
    $region5: #{tpu_custom_call.1} parent=1 // loop_body
      %s26 = ssub.s32 %s21, 1
      %s27 = ssub.s32 %s21, 2
      %s34 = sadd.s32 1, %s29
      %p35 = scmp.ge.s32.totalorder %s34, 2
      %s36 = scalar_select %p35, 0, %s34
      %s37 = sadd.s32 1, %s28
      %s38 = scalar_select %p35, %s37, %s28
      %p39 = scmp.ge.s32.totalorder %s38, 1
      %s40 = scalar_select %p39, 0, %s38
      %s41 = ssub.s32 %s28, %s40
      %p42 = scmp.eq.s32.totalorder %s41, 0
      %s44 = sadd.s32 %s43, 1
      %s45 = scalar_select %p42, %s43, %s44
      %p48 = pneg %p42
      %p49 = scmp.eq.s32.totalorder %s21, 1
      %p50 = por %p48, %p49
      %p51 = scmp.ne.s32.totalorder %s43, %s46
      %p52 = scmp.eq.s32.totalorder %s21, 0
      %p53 = por %p51, %p52
      %p54 = scmp.ne.s32.totalorder %s43, %s46
      %p55 = scmp.eq.s32.totalorder %s26, 1
      %p56 = por %p54, %p55
      %p57 = scmp.ne.s32.totalorder %s46, %s47
      %p58 = scmp.eq.s32.totalorder %s26, 0
      %p59 = por %p57, %p58
      %p60 = scmp.ne.s32.totalorder %s46, %s47
      %p61 = scmp.eq.s32.totalorder %s27, 1
      %p62 = por %p60, %p61
      %p64 = scmp.ne.s32.totalorder %s47, %s63
      %p65 = scmp.eq.s32.totalorder %s27, 0
      %p66 = por %p64, %p65
      %s68 = sadd.s32 %s67, 1
      %p71 = scmp.eq.s32.totalorder %s21, 1
      %p72 = scmp.ne.s32.totalorder %s67, %s69
      %p73 = scmp.eq.s32.totalorder %s21, 0
      %p74 = por %p72, %p73
      %p75 = scmp.ne.s32.totalorder %s67, %s69
      %p76 = scmp.eq.s32.totalorder %s26, 1
      %p77 = por %p75, %p76
      %p78 = scmp.ne.s32.totalorder %s69, %s70
      %p79 = scmp.eq.s32.totalorder %s26, 0
      %p80 = por %p78, %p79
      %p81 = scmp.ne.s32.totalorder %s69, %s70
      %p82 = scmp.eq.s32.totalorder %s27, 1
      %p83 = por %p81, %p82
      %p85 = scmp.ne.s32.totalorder %s70, %s84
      %p86 = scmp.eq.s32.totalorder %s27, 0
      %p87 = por %p85, %p86
      %s88 = ssub.s32 %s29, %s36
      %p89 = scmp.eq.s32.totalorder %s88, 0
      %s91 = sadd.s32 %s90, 1
      %s92 = scalar_select %p89, %s90, %s91
      %p95 = pneg %p89
      %p96 = scmp.eq.s32.totalorder %s21, 1
      %p97 = por %p95, %p96
      %p98 = scmp.ne.s32.totalorder %s90, %s93
      %p99 = scmp.eq.s32.totalorder %s21, 0
      %p100 = por %p98, %p99
      %p101 = scmp.ne.s32.totalorder %s90, %s93
      %p102 = scmp.eq.s32.totalorder %s26, 1
      %p103 = por %p101, %p102
      %p104 = scmp.ne.s32.totalorder %s93, %s94
      %p105 = scmp.eq.s32.totalorder %s26, 0
      %p106 = por %p104, %p105
      %p107 = scmp.ne.s32.totalorder %s93, %s94
      %p108 = scmp.eq.s32.totalorder %s27, 1
      %p109 = por %p107, %p108
      %p111 = scmp.ne.s32.totalorder %s94, %s110
      %p112 = scmp.eq.s32.totalorder %s27, 0
      %p113 = por %p111, %p112
      %s114 = ssub.s32 %s29, %s36
      %p115 = scmp.eq.s32.totalorder %s114, 0
      %s117 = sadd.s32 %s116, 1
      %s118 = scalar_select %p115, %s116, %s117
      %p121 = pneg %p115
      %p122 = scmp.eq.s32.totalorder %s21, 1
      %p123 = por %p121, %p122
      %p124 = scmp.ne.s32.totalorder %s116, %s119
      %p125 = scmp.eq.s32.totalorder %s21, 0
      %p126 = por %p124, %p125
      %p127 = scmp.ne.s32.totalorder %s116, %s119
      %p128 = scmp.eq.s32.totalorder %s26, 1
      %p129 = por %p127, %p128
      %p130 = scmp.ne.s32.totalorder %s119, %s120
      %p131 = scmp.eq.s32.totalorder %s26, 0
      %p132 = por %p130, %p131
      %p133 = scmp.ne.s32.totalorder %s119, %s120
      %p134 = scmp.eq.s32.totalorder %s27, 1
      %p135 = por %p133, %p134
      %p137 = scmp.ne.s32.totalorder %s120, %s136
      %p138 = scmp.eq.s32.totalorder %s27, 0
      %p139 = por %p137, %p138
      %s140 = ssub.s32 %s29, %s36
      %p141 = scmp.eq.s32.totalorder %s140, 0
      %s143 = sadd.s32 %s142, 1
      %s144 = scalar_select %p141, %s142, %s143
      %p147 = pneg %p141
      %p148 = scmp.eq.s32.totalorder %s21, 1
      %p149 = por %p147, %p148
      %p150 = scmp.ne.s32.totalorder %s142, %s145
      %p151 = scmp.eq.s32.totalorder %s21, 0
      %p152 = por %p150, %p151
      %p153 = scmp.ne.s32.totalorder %s142, %s145
      %p154 = scmp.eq.s32.totalorder %s26, 1
      %p155 = por %p153, %p154
      %p156 = scmp.ne.s32.totalorder %s145, %s146
      %p157 = scmp.eq.s32.totalorder %s26, 0
      %p158 = por %p156, %p157
      %p159 = scmp.ne.s32.totalorder %s145, %s146
      %p160 = scmp.eq.s32.totalorder %s27, 1
      %p161 = por %p159, %p160
      %p163 = scmp.ne.s32.totalorder %s146, %s162
      %p164 = scmp.eq.s32.totalorder %s27, 0
      %p165 = por %p163, %p164
      %s166 = ssub.s32 %s29, %s36
      %p167 = scmp.eq.s32.totalorder %s166, 0
      %s169 = sadd.s32 %s168, 1
      %s170 = scalar_select %p167, %s168, %s169
      %p173 = pneg %p167
      %p174 = scmp.eq.s32.totalorder %s21, 1
      %p175 = por %p173, %p174
      %p176 = scmp.ne.s32.totalorder %s168, %s171
      %p177 = scmp.eq.s32.totalorder %s21, 0
      %p178 = por %p176, %p177
      %p179 = scmp.ne.s32.totalorder %s168, %s171
      %p180 = scmp.eq.s32.totalorder %s26, 1
      %p181 = por %p179, %p180
      %p182 = scmp.ne.s32.totalorder %s171, %s172
      %p183 = scmp.eq.s32.totalorder %s26, 0
      %p184 = por %p182, %p183
      %p185 = scmp.ne.s32.totalorder %s171, %s172
      %p186 = scmp.eq.s32.totalorder %s27, 1
      %p187 = por %p185, %p186
      %p189 = scmp.ne.s32.totalorder %s172, %s188
      %p190 = scmp.eq.s32.totalorder %s27, 0
      %p191 = por %p189, %p190
      %s192 = ssub.s32 %s29, %s36
      %p193 = scmp.eq.s32.totalorder %s192, 0
      %s195 = sadd.s32 %s194, 1
      %s196 = scalar_select %p193, %s194, %s195
      %p199 = pneg %p193
      %p200 = scmp.eq.s32.totalorder %s21, 1
      %p201 = por %p199, %p200
      %p202 = scmp.ne.s32.totalorder %s194, %s197
      %p203 = scmp.eq.s32.totalorder %s21, 0
      %p204 = por %p202, %p203
      %p205 = scmp.ne.s32.totalorder %s194, %s197
      %p206 = scmp.eq.s32.totalorder %s26, 1
      %p207 = por %p205, %p206
      %p208 = scmp.ne.s32.totalorder %s197, %s198
      %p209 = scmp.eq.s32.totalorder %s26, 0
      %p210 = por %p208, %p209
      %p211 = scmp.ne.s32.totalorder %s197, %s198
      %p212 = scmp.eq.s32.totalorder %s27, 1
      %p213 = por %p211, %p212
      %p215 = scmp.ne.s32.totalorder %s198, %s214
      %p216 = scmp.eq.s32.totalorder %s27, 0
      %p217 = por %p215, %p216
      %s218 = ssub.s32 %s29, %s36
      %p219 = scmp.eq.s32.totalorder %s218, 0
      %s221 = sadd.s32 %s220, 1
      %s222 = scalar_select %p219, %s220, %s221
      %p225 = pneg %p219
      %p226 = scmp.eq.s32.totalorder %s21, 1
      %p227 = por %p225, %p226
      %p228 = scmp.ne.s32.totalorder %s220, %s223
      %p229 = scmp.eq.s32.totalorder %s21, 0
      %p230 = por %p228, %p229
      %p231 = scmp.ne.s32.totalorder %s220, %s223
      %p232 = scmp.eq.s32.totalorder %s26, 1
      %p233 = por %p231, %p232
      %p234 = scmp.ne.s32.totalorder %s223, %s224
      %p235 = scmp.eq.s32.totalorder %s26, 0
      %p236 = por %p234, %p235
      %p237 = scmp.ne.s32.totalorder %s223, %s224
      %p238 = scmp.eq.s32.totalorder %s27, 1
      %p239 = por %p237, %p238
      %p241 = scmp.ne.s32.totalorder %s224, %s240
      %p242 = scmp.eq.s32.totalorder %s27, 0
      %p243 = por %p241, %p242
      %s244 = ssub.s32 %s29, %s36
      %p245 = scmp.eq.s32.totalorder %s244, 0
      %s247 = sadd.s32 %s246, 1
      %s248 = scalar_select %p245, %s246, %s247
      %p251 = pneg %p245
      %p252 = scmp.eq.s32.totalorder %s21, 1
      %p253 = por %p251, %p252
      %p254 = scmp.ne.s32.totalorder %s246, %s249
      %p255 = scmp.eq.s32.totalorder %s21, 0
      %p256 = por %p254, %p255
      %p257 = scmp.ne.s32.totalorder %s246, %s249
      %p258 = scmp.eq.s32.totalorder %s26, 1
      %p259 = por %p257, %p258
      %p260 = scmp.ne.s32.totalorder %s249, %s250
      %p261 = scmp.eq.s32.totalorder %s26, 0
      %p262 = por %p260, %p261
      %p263 = scmp.ne.s32.totalorder %s249, %s250
      %p264 = scmp.eq.s32.totalorder %s27, 1
      %p265 = por %p263, %p264
      %p267 = scmp.ne.s32.totalorder %s250, %s266
      %p268 = scmp.eq.s32.totalorder %s27, 0
      %p269 = por %p267, %p268
      %s270 = ssub.s32 %s29, %s36
      %p271 = scmp.eq.s32.totalorder %s270, 0
      %s273 = sadd.s32 %s272, 1
      %s274 = scalar_select %p271, %s272, %s273
      %p277 = pneg %p271
      %p278 = scmp.eq.s32.totalorder %s21, 1
      %p279 = por %p277, %p278
      %p280 = scmp.ne.s32.totalorder %s272, %s275
      %p281 = scmp.eq.s32.totalorder %s21, 0
      %p282 = por %p280, %p281
      %p283 = scmp.ne.s32.totalorder %s272, %s275
      %p284 = scmp.eq.s32.totalorder %s26, 1
      %p285 = por %p283, %p284
      %p286 = scmp.ne.s32.totalorder %s275, %s276
      %p287 = scmp.eq.s32.totalorder %s26, 0
      %p288 = por %p286, %p287
      %p289 = scmp.ne.s32.totalorder %s275, %s276
      %p290 = scmp.eq.s32.totalorder %s27, 1
      %p291 = por %p289, %p290
      %p293 = scmp.ne.s32.totalorder %s276, %s292
      %p294 = scmp.eq.s32.totalorder %s27, 0
      %p295 = por %p293, %p294
      %s296 = ssub.s32 %s29, %s36
      %p297 = scmp.eq.s32.totalorder %s296, 0
      %s299 = sadd.s32 %s298, 1
      %s300 = scalar_select %p297, %s298, %s299
      %p303 = pneg %p297
      %p304 = scmp.eq.s32.totalorder %s21, 1
      %p305 = por %p303, %p304
      %p306 = scmp.ne.s32.totalorder %s298, %s301
      %p307 = scmp.eq.s32.totalorder %s21, 0
      %p308 = por %p306, %p307
      %p309 = scmp.ne.s32.totalorder %s298, %s301
      %p310 = scmp.eq.s32.totalorder %s26, 1
      %p311 = por %p309, %p310
      %p312 = scmp.ne.s32.totalorder %s301, %s302
      %p313 = scmp.eq.s32.totalorder %s26, 0
      %p314 = por %p312, %p313
      %p315 = scmp.ne.s32.totalorder %s301, %s302
      %p316 = scmp.eq.s32.totalorder %s27, 1
      %p317 = por %p315, %p316
      %p319 = scmp.ne.s32.totalorder %s302, %s318
      %p320 = scmp.eq.s32.totalorder %s27, 0
      %p321 = por %p319, %p320
      %s322 = ssub.s32 %s29, %s36
      %p323 = scmp.eq.s32.totalorder %s322, 0
      %s325 = sadd.s32 %s324, 1
      %s326 = scalar_select %p323, %s324, %s325
      %p329 = pneg %p323
      %p330 = scmp.eq.s32.totalorder %s21, 1
      %p331 = por %p329, %p330
      %p332 = scmp.ne.s32.totalorder %s324, %s327
      %p333 = scmp.eq.s32.totalorder %s21, 0
      %p334 = por %p332, %p333
      %p335 = scmp.ne.s32.totalorder %s324, %s327
      %p336 = scmp.eq.s32.totalorder %s26, 1
      %p337 = por %p335, %p336
      %p338 = scmp.ne.s32.totalorder %s327, %s328
      %p339 = scmp.eq.s32.totalorder %s26, 0
      %p340 = por %p338, %p339
      %p341 = scmp.ne.s32.totalorder %s327, %s328
      %p342 = scmp.eq.s32.totalorder %s27, 1
      %p343 = por %p341, %p342
      %p345 = scmp.ne.s32.totalorder %s328, %s344
      %p346 = scmp.eq.s32.totalorder %s27, 0
      %p347 = por %p345, %p346
      %s348 = ssub.s32 %s29, %s36
      %p349 = scmp.eq.s32.totalorder %s348, 0
      %s351 = sadd.s32 %s350, 1
      %s352 = scalar_select %p349, %s350, %s351
      %p355 = pneg %p349
      %p356 = scmp.eq.s32.totalorder %s21, 1
      %p357 = por %p355, %p356
      %p358 = scmp.ne.s32.totalorder %s350, %s353
      %p359 = scmp.eq.s32.totalorder %s21, 0
      %p360 = por %p358, %p359
      %p361 = scmp.ne.s32.totalorder %s350, %s353
      %p362 = scmp.eq.s32.totalorder %s26, 1
      %p363 = por %p361, %p362
      %p364 = scmp.ne.s32.totalorder %s353, %s354
      %p365 = scmp.eq.s32.totalorder %s26, 0
      %p366 = por %p364, %p365
      %p367 = scmp.ne.s32.totalorder %s353, %s354
      %p368 = scmp.eq.s32.totalorder %s27, 1
      %p369 = por %p367, %p368
      %p371 = scmp.ne.s32.totalorder %s354, %s370
      %p372 = scmp.eq.s32.totalorder %s27, 0
      %p373 = por %p371, %p372
      %s374 = ssub.s32 %s29, %s36
      %p375 = scmp.eq.s32.totalorder %s374, 0
      %s377 = sadd.s32 %s376, 1
      %s378 = scalar_select %p375, %s376, %s377
      %p381 = pneg %p375
      %p382 = scmp.eq.s32.totalorder %s21, 1
      %p383 = por %p381, %p382
      %p384 = scmp.ne.s32.totalorder %s376, %s379
      %p385 = scmp.eq.s32.totalorder %s21, 0
      %p386 = por %p384, %p385
      %p387 = scmp.ne.s32.totalorder %s376, %s379
      %p388 = scmp.eq.s32.totalorder %s26, 1
      %p389 = por %p387, %p388
      %p390 = scmp.ne.s32.totalorder %s379, %s380
      %p391 = scmp.eq.s32.totalorder %s26, 0
      %p392 = por %p390, %p391
      %p393 = scmp.ne.s32.totalorder %s379, %s380
      %p394 = scmp.eq.s32.totalorder %s27, 1
      %p395 = por %p393, %p394
      %p397 = scmp.ne.s32.totalorder %s380, %s396
      %p398 = scmp.eq.s32.totalorder %s27, 0
      %p399 = por %p397, %p398
      %s400 = ssub.s32 %s28, %s40
      %p401 = scmp.eq.s32.totalorder %s400, 0
      %s403 = sadd.s32 %s402, 1
      %s404 = scalar_select %p401, %s402, %s403
      %p407 = pneg %p401
      %p408 = scmp.eq.s32.totalorder %s21, 1
      %p409 = por %p407, %p408
      %p410 = scmp.ne.s32.totalorder %s402, %s405
      %p411 = scmp.eq.s32.totalorder %s21, 0
      %p412 = por %p410, %p411
      %p413 = scmp.ne.s32.totalorder %s402, %s405
      %p414 = scmp.eq.s32.totalorder %s26, 1
      %p415 = por %p413, %p414
      %p416 = scmp.ne.s32.totalorder %s405, %s406
      %p417 = scmp.eq.s32.totalorder %s26, 0
      %p418 = por %p416, %p417
      %p419 = scmp.ne.s32.totalorder %s405, %s406
      %p420 = scmp.eq.s32.totalorder %s27, 1
      %p421 = por %p419, %p420
      %p423 = scmp.ne.s32.totalorder %s406, %s422
      %p424 = scmp.eq.s32.totalorder %s27, 0
      %p425 = por %p423, %p424
      %p426 = scmp.le.s32.totalorder 1, %s21
      %p427 = scmp.lt.s32.totalorder %s21, 3
      %p428 = pnand %p426, %p427
      %p429 = pneg %p428
      // Predicated region
      $region9: #{tpu_custom_call.1} parent=5 // pred_check
        _
      $region10: #{tpu_custom_call.1} parent=5 // pred_check_branch
        %431 = sbr.rel (%p428) target = $region12
      $region11: #{tpu_custom_call.1} parent=5 // pred_region
        %s432 = ssub.s32 %s21, 1
        // Predicated region
        $region13: #{tpu_custom_call.1} parent=11 // pred_check
          %p433 = pneg %p59
        $region14: #{tpu_custom_call.1} parent=11 // pred_check_branch
          %435 = sbr.rel (%p433) target = $region16
        $region15: #{tpu_custom_call.1} parent=11 // pred_region
          %s436 = smul.u32 2, %s30
          %p437 = scmp.lt.s32.totalorder %s436, 1
          %s438 = scalar_select %p437, %s436, 1
          %s439 = smul.addr %s438, 8
          %s440 = scalar_lea.vmem %s0, %s439
          %s441 = smul.u32 2, %s30
        $region16: #{tpu_custom_call.1} parent=11 // pred_fallthru
          _
        // Predicated region
        $region17: #{tpu_custom_call.1} parent=11 // pred_check
          %p442 = pneg %p80
        $region18: #{tpu_custom_call.1} parent=11 // pred_check_branch
          %444 = sbr.rel (%p442) target = $region20
        $region19: #{tpu_custom_call.1} parent=11 // pred_region
          _
        $region20: #{tpu_custom_call.1} parent=11 // pred_fallthru
          _
      $region12: #{tpu_custom_call.1} parent=5 // pred_fallthru
        _
      %p445 = scmp.lt.s32.totalorder %s21, 2
      // Predicated region
      $region21: #{tpu_custom_call.1} parent=5 // pred_check
        %p446 = pneg %p445
      $region22: #{tpu_custom_call.1} parent=5 // pred_check_branch
        %448 = sbr.rel (%p446) target = $region24
      $region23: #{tpu_custom_call.1} parent=5 // pred_region
        // Predicated region
        $region25: #{tpu_custom_call.1} parent=23 // pred_check
          %p449 = pneg %p100
        $region26: #{tpu_custom_call.1} parent=23 // pred_check_branch
          %451 = sbr.rel (%p449) target = $region28
        $region27: #{tpu_custom_call.1} parent=23 // pred_region
          %p452 = scmp.lt.s32.totalorder %s29, 1
          %s453 = scalar_select %p452, %s29, 1
          %s454 = smul.addr %s453, 16
          %s455 = smul.addr %s454, 8
          %s456 = scalar_lea.vmem %s2, %s455
        $region28: #{tpu_custom_call.1} parent=23 // pred_fallthru
          _
        // Predicated region
        $region29: #{tpu_custom_call.1} parent=23 // pred_check
          %p457 = pneg %p126
        $region30: #{tpu_custom_call.1} parent=23 // pred_check_branch
          %459 = sbr.rel (%p457) target = $region32
        $region31: #{tpu_custom_call.1} parent=23 // pred_region
          %p460 = scmp.lt.s32.totalorder %s29, 1
          %s461 = scalar_select %p460, %s29, 1
          %s462 = smul.addr %s461, 16
          %s463 = smul.addr %s462, 8
          %s464 = scalar_lea.vmem %s3, %s463
        $region32: #{tpu_custom_call.1} parent=23 // pred_fallthru
          _
        // Predicated region
        $region33: #{tpu_custom_call.1} parent=23 // pred_check
          %p465 = pneg %p152
        $region34: #{tpu_custom_call.1} parent=23 // pred_check_branch
          %467 = sbr.rel (%p465) target = $region36
        $region35: #{tpu_custom_call.1} parent=23 // pred_region
          %p468 = scmp.lt.s32.totalorder %s29, 1
          %s469 = scalar_select %p468, %s29, 1
          %s470 = smul.addr %s469, 16
          %s471 = smul.addr %s470, 8
          %s472 = scalar_lea.vmem %s4, %s471
        $region36: #{tpu_custom_call.1} parent=23 // pred_fallthru
          _
        // Predicated region
        $region37: #{tpu_custom_call.1} parent=23 // pred_check
          %p473 = pneg %p178
        $region38: #{tpu_custom_call.1} parent=23 // pred_check_branch
          %475 = sbr.rel (%p473) target = $region40
        $region39: #{tpu_custom_call.1} parent=23 // pred_region
          %p476 = scmp.lt.s32.totalorder %s29, 1
          %s477 = scalar_select %p476, %s29, 1
          %s478 = smul.addr %s477, 4
          %s479 = smul.addr %s478, 8
          %s480 = scalar_lea.vmem %s5, %s479
        $region40: #{tpu_custom_call.1} parent=23 // pred_fallthru
          _
        // Predicated region
        $region41: #{tpu_custom_call.1} parent=23 // pred_check
          %p481 = pneg %p204
        $region42: #{tpu_custom_call.1} parent=23 // pred_check_branch
          %483 = sbr.rel (%p481) target = $region44
        $region43: #{tpu_custom_call.1} parent=23 // pred_region
          %p484 = scmp.lt.s32.totalorder %s29, 1
          %s485 = scalar_select %p484, %s29, 1
          %s486 = scalar_lea.vmem %s6, %s485
        $region44: #{tpu_custom_call.1} parent=23 // pred_fallthru
          _
        // Predicated region
        $region45: #{tpu_custom_call.1} parent=23 // pred_check
          %p487 = pneg %p230
        $region46: #{tpu_custom_call.1} parent=23 // pred_check_branch
          %489 = sbr.rel (%p487) target = $region48
        $region47: #{tpu_custom_call.1} parent=23 // pred_region
          %p490 = scmp.lt.s32.totalorder %s29, 1
          %s491 = scalar_select %p490, %s29, 1
          %s492 = scalar_lea.vmem %s7, %s491
        $region48: #{tpu_custom_call.1} parent=23 // pred_fallthru
          _
        // Predicated region
        $region49: #{tpu_custom_call.1} parent=23 // pred_check
          %p493 = pneg %p256
        $region50: #{tpu_custom_call.1} parent=23 // pred_check_branch
          %495 = sbr.rel (%p493) target = $region52
        $region51: #{tpu_custom_call.1} parent=23 // pred_region
          %p496 = scmp.lt.s32.totalorder %s29, 1
          %s497 = scalar_select %p496, %s29, 1
          %s498 = smul.addr %s497, 4
          %s499 = smul.addr %s498, 8
          %s500 = scalar_lea.vmem %s8, %s499
        $region52: #{tpu_custom_call.1} parent=23 // pred_fallthru
          _
        // Predicated region
        $region53: #{tpu_custom_call.1} parent=23 // pred_check
          %p501 = pneg %p282
        $region54: #{tpu_custom_call.1} parent=23 // pred_check_branch
          %503 = sbr.rel (%p501) target = $region56
        $region55: #{tpu_custom_call.1} parent=23 // pred_region
          %p504 = scmp.lt.s32.totalorder %s29, 1
          %s505 = scalar_select %p504, %s29, 1
          %s506 = scalar_lea.vmem %s9, %s505
        $region56: #{tpu_custom_call.1} parent=23 // pred_fallthru
          _
        // Predicated region
        $region57: #{tpu_custom_call.1} parent=23 // pred_check
          %p507 = pneg %p308
        $region58: #{tpu_custom_call.1} parent=23 // pred_check_branch
          %509 = sbr.rel (%p507) target = $region60
        $region59: #{tpu_custom_call.1} parent=23 // pred_region
          %p510 = scmp.lt.s32.totalorder %s29, 1
          %s511 = scalar_select %p510, %s29, 1
          %s512 = smul.addr %s511, 8
          %s513 = smul.addr %s512, 8
          %s514 = scalar_lea.vmem %s10, %s513
        $region60: #{tpu_custom_call.1} parent=23 // pred_fallthru
          _
        // Predicated region
        $region61: #{tpu_custom_call.1} parent=23 // pred_check
          %p515 = pneg %p334
        $region62: #{tpu_custom_call.1} parent=23 // pred_check_branch
          %517 = sbr.rel (%p515) target = $region64
        $region63: #{tpu_custom_call.1} parent=23 // pred_region
          %p518 = scmp.lt.s32.totalorder %s29, 1
          %s519 = scalar_select %p518, %s29, 1
          %s520 = scalar_lea.vmem %s11, %s519
        $region64: #{tpu_custom_call.1} parent=23 // pred_fallthru
          _
        // Predicated region
        $region65: #{tpu_custom_call.1} parent=23 // pred_check
          %p521 = pneg %p360
        $region66: #{tpu_custom_call.1} parent=23 // pred_check_branch
          %523 = sbr.rel (%p521) target = $region68
        $region67: #{tpu_custom_call.1} parent=23 // pred_region
          %p524 = scmp.lt.s32.totalorder %s29, 1
          %s525 = scalar_select %p524, %s29, 1
          %s526 = scalar_lea.vmem %s12, %s525
        $region68: #{tpu_custom_call.1} parent=23 // pred_fallthru
          _
        // Predicated region
        $region69: #{tpu_custom_call.1} parent=23 // pred_check
          %p527 = pneg %p386
        $region70: #{tpu_custom_call.1} parent=23 // pred_check_branch
          %529 = sbr.rel (%p527) target = $region72
        $region71: #{tpu_custom_call.1} parent=23 // pred_region
          %p530 = scmp.lt.s32.totalorder %s29, 1
          %s531 = scalar_select %p530, %s29, 1
          %s532 = scalar_lea.vmem %s13, %s531
        $region72: #{tpu_custom_call.1} parent=23 // pred_fallthru
          _
      $region24: #{tpu_custom_call.1} parent=5 // pred_fallthru
        _
      %p533 = scmp.le.s32.totalorder 1, %s21
      %p534 = scmp.lt.s32.totalorder %s21, 3
      %p535 = pnand %p533, %p534
      %p536 = pneg %p535
      // Predicated region
      $region73: #{tpu_custom_call.1} parent=5 // pred_check
        _
      $region74: #{tpu_custom_call.1} parent=5 // pred_check_branch
        %538 = sbr.rel (%p535) target = $region76
      $region75: #{tpu_custom_call.1} parent=5 // pred_region
        %s539 = ssub.s32 %s21, 1
        %s540 = smul.u32 2, %s30
        %p541 = scmp.lt.s32.totalorder %s540, 1
        %s542 = scalar_select %p541, %s540, 1
        %s543 = smul.addr %s542, 8
        %s544 = scalar_lea.vmem %s0, %s543
        %p545 = pneg %p59
        %p546 = pneg %p56
        %p547 = pneg %p80
        %p548 = pneg %p77
        %p549 = scmp.lt.s32.totalorder %s31, 1
        %s550 = scalar_select %p549, %s31, 1
        %s551 = smul.addr %s550, 16
        %s552 = smul.addr %s551, 8
        %s553 = scalar_lea.vmem %s2, %s552
        %p554 = pneg %p106
        %p555 = pneg %p103
        %p556 = scmp.lt.s32.totalorder %s31, 1
        %s557 = scalar_select %p556, %s31, 1
        %s558 = smul.addr %s557, 16
        %s559 = smul.addr %s558, 8
        %s560 = scalar_lea.vmem %s3, %s559
        %p561 = pneg %p132
        %p562 = pneg %p129
        %p563 = scmp.lt.s32.totalorder %s31, 1
        %s564 = scalar_select %p563, %s31, 1
        %s565 = smul.addr %s564, 16
        %s566 = smul.addr %s565, 8
        %s567 = scalar_lea.vmem %s4, %s566
        %p568 = pneg %p158
        %p569 = pneg %p155
        %p570 = scmp.lt.s32.totalorder %s31, 1
        %s571 = scalar_select %p570, %s31, 1
        %s572 = smul.addr %s571, 4
        %s573 = smul.addr %s572, 8
        %s574 = scalar_lea.vmem %s5, %s573
        %p575 = pneg %p184
        %p576 = pneg %p181
        %p577 = scmp.lt.s32.totalorder %s31, 1
        %s578 = scalar_select %p577, %s31, 1
        %s579 = scalar_lea.vmem %s6, %s578
        %p580 = pneg %p210
        %p581 = pneg %p207
        %p582 = scmp.lt.s32.totalorder %s31, 1
        %s583 = scalar_select %p582, %s31, 1
        %s584 = scalar_lea.vmem %s7, %s583
        %p585 = pneg %p236
        %p586 = pneg %p233
        %p587 = scmp.lt.s32.totalorder %s31, 1
        %s588 = scalar_select %p587, %s31, 1
        %s589 = smul.addr %s588, 4
        %s590 = smul.addr %s589, 8
        %s591 = scalar_lea.vmem %s8, %s590
        %p592 = pneg %p262
        %p593 = pneg %p259
        %p594 = scmp.lt.s32.totalorder %s31, 1
        %s595 = scalar_select %p594, %s31, 1
        %s596 = scalar_lea.vmem %s9, %s595
        %p597 = pneg %p288
        %p598 = pneg %p285
        %p599 = scmp.lt.s32.totalorder %s31, 1
        %s600 = scalar_select %p599, %s31, 1
        %s601 = smul.addr %s600, 8
        %s602 = smul.addr %s601, 8
        %s603 = scalar_lea.vmem %s10, %s602
        %p604 = pneg %p314
        %p605 = pneg %p311
        %p606 = scmp.lt.s32.totalorder %s31, 1
        %s607 = scalar_select %p606, %s31, 1
        %s608 = scalar_lea.vmem %s11, %s607
        %p609 = pneg %p340
        %p610 = pneg %p337
        %p611 = scmp.lt.s32.totalorder %s31, 1
        %s612 = scalar_select %p611, %s31, 1
        %s613 = scalar_lea.vmem %s12, %s612
        %p614 = pneg %p366
        %p615 = pneg %p363
        %p616 = scmp.lt.s32.totalorder %s31, 1
        %s617 = scalar_select %p616, %s31, 1
        %s618 = scalar_lea.vmem %s13, %s617
        %p619 = pneg %p392
        %p620 = pneg %p389
        %p621 = pneg %p418
        %p622 = pneg %p415
        %s623 = smul.u32 2, %s30
        %p624 = scmp.lt.s32.totalorder %s623, 1
        %s625 = scalar_select %p624, %s623, 1
        %s626 = smul.addr %s625, 8
        %s627 = scalar_lea.vmem %s0, %s626
        %s628 = smul.u32 2, %s30
        %p629 = scmp.lt.s32.totalorder %s31, 1
        %s630 = scalar_select %p629, %s31, 1
        %s631 = smul.addr %s630, 16
        %s632 = smul.addr %s631, 8
        %s633 = scalar_lea.vmem %s2, %s632
        %p634 = scmp.lt.s32.totalorder %s31, 1
        %s635 = scalar_select %p634, %s31, 1
        %s636 = smul.addr %s635, 16
        %s637 = smul.addr %s636, 8
        %s638 = scalar_lea.vmem %s3, %s637
        %p639 = scmp.lt.s32.totalorder %s31, 1
        %s640 = scalar_select %p639, %s31, 1
        %s641 = smul.addr %s640, 16
        %s642 = smul.addr %s641, 8
        %s643 = scalar_lea.vmem %s4, %s642
        %p644 = scmp.lt.s32.totalorder %s31, 1
        %s645 = scalar_select %p644, %s31, 1
        %s646 = smul.addr %s645, 4
        %s647 = smul.addr %s646, 8
        %s648 = scalar_lea.vmem %s5, %s647
        %p649 = scmp.lt.s32.totalorder %s31, 1
        %s650 = scalar_select %p649, %s31, 1
        %s651 = scalar_lea.vmem %s6, %s650
        %p652 = scmp.lt.s32.totalorder %s31, 1
        %s653 = scalar_select %p652, %s31, 1
        %s654 = scalar_lea.vmem %s7, %s653
        %p655 = scmp.lt.s32.totalorder %s31, 1
        %s656 = scalar_select %p655, %s31, 1
        %s657 = smul.addr %s656, 4
        %s658 = smul.addr %s657, 8
        %s659 = scalar_lea.vmem %s8, %s658
        %p660 = scmp.lt.s32.totalorder %s31, 1
        %s661 = scalar_select %p660, %s31, 1
        %s662 = scalar_lea.vmem %s9, %s661
        %p663 = scmp.lt.s32.totalorder %s31, 1
        %s664 = scalar_select %p663, %s31, 1
        %s665 = smul.addr %s664, 8
        %s666 = smul.addr %s665, 8
        %s667 = scalar_lea.vmem %s10, %s666
        %p668 = scmp.lt.s32.totalorder %s31, 1
        %s669 = scalar_select %p668, %s31, 1
        %s670 = scalar_lea.vmem %s11, %s669
        %p671 = scmp.lt.s32.totalorder %s31, 1
        %s672 = scalar_select %p671, %s31, 1
        %s673 = scalar_lea.vmem %s12, %s672
        %p674 = scmp.lt.s32.totalorder %s31, 1
        %s675 = scalar_select %p674, %s31, 1
        %s676 = scalar_lea.vmem %s13, %s675
        %s677 = smul.u32 2, %s30
        %p678 = scmp.eq.s32.totalorder %s31, 0
        // Predicated region
        $region77: #{tpu_custom_call.1} parent=75 // pred_check
          %p679 = pneg %p678
        $region78: #{tpu_custom_call.1} parent=75 // pred_check_branch
          %681 = sbr.rel (%p679) target = $region80
        $region79: #{tpu_custom_call.1} parent=75 // pred_region
          %v682 = vld [vmem:[%s627] sm:$0xff]
          %v683 = vld [vmem:[%s627 + $0x8] sm:$0xff]
          %vm684 = vcmask 261120
          %685 = vst.msk [vmem:[#allocation2] sm:$0xff] %vm684, %v682
          %686 = vst.msk [vmem:[#allocation2 + $0x8] sm:$0xff] %vm684, %v683
        $region80: #{tpu_custom_call.1} parent=75 // pred_fallthru
          _
        %v687 = vld [vmem:[#allocation2] sm:$0xff]
        %v688 = vld [vmem:[#allocation2 + $0x8] sm:$0xff]
        %v689 = vld [vmem:[%s1] sm:$0xff]
        %v690 = vld [vmem:[%s651] sm:$0x1]
        %v691 = vld [vmem:[%s654] sm:$0x1]
        %v692 = vld [vmem:[%s673] sm:$0x1]
        %v693 = vld [vmem:[%s676] sm:$0x1]
        %v694 = vld [vmem:[%s633] sm:$0xff]
        %v695 = vld [vmem:[%s633 + $0x8] sm:$0xff]
        %v696 = vld [vmem:[%s633 + $0x10] sm:$0xff]
        %v697 = vld [vmem:[%s633 + $0x18] sm:$0xff]
        %v698 = vld [vmem:[%s638] sm:$0xff]
        %v699 = vld [vmem:[%s638 + $0x8] sm:$0xff]
        %v700 = vld [vmem:[%s638 + $0x10] sm:$0xff]
        %v701 = vld [vmem:[%s638 + $0x18] sm:$0xff]
        %v702 = vld [vmem:[%s643] sm:$0xff]
        %v703 = vld [vmem:[%s643 + $0x8] sm:$0xff]
        %v704 = vld [vmem:[%s643 + $0x10] sm:$0xff]
        %v705 = vld [vmem:[%s643 + $0x18] sm:$0xff]
        %v706 = vld [vmem:[%s648] sm:$0xff]
        %vm707 = vcmask 261120
        %v709 = vsel %vm707, %v687, 0
        %v712 = vsel %vm707, %v688, 0
        %714 = vmatpush.msra.mxu0 0.0
        %715 = vmatpush.msra.mxu0 0.0
        %716 = vmatpush.msra.mxu0 0.0
        %717 = vmatpush.msra.mxu0 0.0
        %718 = vmatpush.msra.mxu0 0.0
        %719 = vmatpush.msra.mxu0 0.0
        %720 = vmatpush.msra.mxu0 0.0
        %721 = vmatpush.msra.mxu0 0.0
        %722 = vmatpush.msra.mxu0 0.0
        %723 = vmatpush.msra.mxu0 0.0
        %724 = vmatpush.msra.mxu0 0.0
        %725 = vmatpush.msra.mxu0 0.0
        %726 = vmatpush.msra.mxu0 %v697
        %727 = vmatpush.msra.mxu0 %v696
        %728 = vmatpush.msra.mxu0 %v695
        %729 = vmatpush.msra.mxu0 %v694
        %730 = vmatmul.f32.gmra.mxu0 %v709
        %v731 = vpop.f32.mrf.mxu0
        %v732 = vadd.f32 0.0, %v731
        %733 = vmatmul.f32.gmra.mxu0 %v712
        %v734 = vpop.f32.mrf.mxu0
        %v735 = vadd.f32 0.0, %v734
        %736 = vdwg.mxu0
        %737 = vmatpush.msra.mxu0 0.0
        %738 = vmatpush.msra.mxu0 0.0
        %739 = vmatpush.msra.mxu0 0.0
        %740 = vmatpush.msra.mxu0 0.0
        %741 = vmatpush.msra.mxu0 0.0
        %742 = vmatpush.msra.mxu0 0.0
        %743 = vmatpush.msra.mxu0 0.0
        %744 = vmatpush.msra.mxu0 0.0
        %745 = vmatpush.msra.mxu0 0.0
        %746 = vmatpush.msra.mxu0 0.0
        %747 = vmatpush.msra.mxu0 0.0
        %748 = vmatpush.msra.mxu0 0.0
        %749 = vmatpush.msra.mxu0 %v701
        %750 = vmatpush.msra.mxu0 %v700
        %751 = vmatpush.msra.mxu0 %v699
        %752 = vmatpush.msra.mxu0 %v698
        %753 = vmatmul.f32.gmra.mxu0 %v709
        %v754 = vpop.f32.mrf.mxu0
        %v755 = vadd.f32 0.0, %v754
        %756 = vmatmul.f32.gmra.mxu0 %v712
        %v757 = vpop.f32.mrf.mxu0
        %v758 = vadd.f32 0.0, %v757
        %759 = vdwg.mxu0
        %760 = vmatpush.msra.mxu0 0.0
        %761 = vmatpush.msra.mxu0 0.0
        %762 = vmatpush.msra.mxu0 0.0
        %763 = vmatpush.msra.mxu0 0.0
        %764 = vmatpush.msra.mxu0 0.0
        %765 = vmatpush.msra.mxu0 0.0
        %766 = vmatpush.msra.mxu0 0.0
        %767 = vmatpush.msra.mxu0 0.0
        %768 = vmatpush.msra.mxu0 0.0
        %769 = vmatpush.msra.mxu0 0.0
        %770 = vmatpush.msra.mxu0 0.0
        %771 = vmatpush.msra.mxu0 0.0
        %772 = vmatpush.msra.mxu0 %v705
        %773 = vmatpush.msra.mxu0 %v704
        %774 = vmatpush.msra.mxu0 %v703
        %775 = vmatpush.msra.mxu0 %v702
        %776 = vmatmul.f32.gmra.mxu0 %v709
        %v777 = vpop.f32.mrf.mxu0
        %v778 = vadd.f32 0.0, %v777
        %779 = vmatmul.f32.gmra.mxu0 %v712
        %v780 = vpop.f32.mrf.mxu0
        %v781 = vadd.f32 0.0, %v780
        %782 = vdwg.mxu0
        %vm783 = vcmask 64512
        %v785 = vsel %vm783, %v732, 0
        %v788 = vsel %vm783, %v755, 0
        %790 = vmatpush.xpose.msra.mxu0 0.0
        %791 = vmatpush.xpose.msra.mxu0 0.0
        %792 = vmatpush.xpose.msra.mxu0 0.0
        %793 = vmatpush.xpose.msra.mxu0 0.0
        %794 = vmatpush.xpose.msra.mxu0 0.0
        %795 = vmatpush.xpose.msra.mxu0 0.0
        %796 = vmatpush.xpose.msra.mxu0 0.0
        %797 = vmatpush.xpose.msra.mxu0 0.0
        %798 = vmatpush.xpose.msra.mxu0 0.0
        %799 = vmatpush.xpose.msra.mxu0 0.0
        %800 = vmatpush.xpose.msra.mxu0 0.0
        %801 = vmatpush.xpose.msra.mxu0 0.0
        %802 = vmatpush.xpose.msra.mxu0 0.0
        %803 = vmatpush.xpose.msra.mxu0 0.0
        %804 = vmatpush.xpose.msra.mxu0 0.0
        %805 = vmatpush.xpose.msra.mxu0 %v788
        %806 = vmatmul.f32.gmra.mxu0 %v785
        %v807 = vpop.f32.mrf.mxu0
        %v808 = vadd.f32 %v689, %v807
        %809 = vdwg.mxu0
        %v811 = vsel %vm783, %v735, 0
        %v814 = vsel %vm783, %v758, 0
        %816 = vmatpush.xpose.msra.mxu0 0.0
        %817 = vmatpush.xpose.msra.mxu0 0.0
        %818 = vmatpush.xpose.msra.mxu0 0.0
        %819 = vmatpush.xpose.msra.mxu0 0.0
        %820 = vmatpush.xpose.msra.mxu0 0.0
        %821 = vmatpush.xpose.msra.mxu0 0.0
        %822 = vmatpush.xpose.msra.mxu0 0.0
        %823 = vmatpush.xpose.msra.mxu0 0.0
        %824 = vmatpush.xpose.msra.mxu0 0.0
        %825 = vmatpush.xpose.msra.mxu0 0.0
        %826 = vmatpush.xpose.msra.mxu0 0.0
        %827 = vmatpush.xpose.msra.mxu0 0.0
        %828 = vmatpush.xpose.msra.mxu0 0.0
        %829 = vmatpush.xpose.msra.mxu0 0.0
        %830 = vmatpush.xpose.msra.mxu0 0.0
        %831 = vmatpush.xpose.msra.mxu0 %v814
        %832 = vmatmul.f32.gmra.mxu0 %v811
        %v833 = vpop.f32.mrf.mxu0
        %v834 = vadd.f32 %v689, %v833
        %835 = vdwg.mxu0
        %v836 = vsel %vm783, %v808, -inf
        %837 = vmax.xlane.f32.xlu0 %v836
        %v838 = vpop.xlane.xlu0 %837
        %v839 = vsel %vm783, %v834, -inf
        %840 = vmax.xlane.f32.xlu0 %v839
        %v841 = vpop.xlane.xlu0 %840
        %v842 = vsub.f32 %v808, %v838
        %v843 = vsub.f32 %v834, %v841
        %v844 = vmul.f32 %v842, 1.442695
        %v845 = vpow.pop %v844
        %v846 = vmul.f32 %v843, 1.442695
        %v847 = vpow.pop %v846
        %v848 = vsel %vm783, %v845, 0.0
        %849 = vadd.xlane.f32.xlu0 %v848
        %v850 = vpop.xlane.xlu0 %849
        %v851 = vsel %vm783, %v847, 0.0
        %852 = vadd.xlane.f32.xlu0 %v851
        %v853 = vpop.xlane.xlu0 %852
        %v854 = vrcp.pop %v850
        %v855 = vrcp.pop %v853
        %v856 = vmul.f32 %v845, %v854
        %v857 = vmul.f32 %v847, %v855
        %v859 = vsel %vm783, %v856, 0
        %861 = vmatpush.msra.mxu0 0.0
        %862 = vmatpush.msra.mxu0 0.0
        %863 = vmatpush.msra.mxu0 0.0
        %864 = vmatpush.msra.mxu0 0.0
        %865 = vmatpush.msra.mxu0 0.0
        %866 = vmatpush.msra.mxu0 0.0
        %867 = vmatpush.msra.mxu0 0.0
        %868 = vmatpush.msra.mxu0 0.0
        %869 = vmatpush.msra.mxu0 0.0
        %870 = vmatpush.msra.mxu0 0.0
        %871 = vmatpush.msra.mxu0 0.0
        %872 = vmatpush.msra.mxu0 0.0
        %873 = vmatpush.msra.mxu0 0.0
        %874 = vmatpush.msra.mxu0 0.0
        %875 = vmatpush.msra.mxu0 0.0
        %876 = vmatpush.msra.mxu0 %v778
        %877 = vmatmul.f32.gmra.mxu0 %v859
        %v878 = vpop.f32.mrf.mxu0
        %v879 = vadd.f32 0.0, %v878
        %880 = vdwg.mxu0
        %v882 = vsel %vm783, %v857, 0
        %884 = vmatpush.msra.mxu0 0.0
        %885 = vmatpush.msra.mxu0 0.0
        %886 = vmatpush.msra.mxu0 0.0
        %887 = vmatpush.msra.mxu0 0.0
        %888 = vmatpush.msra.mxu0 0.0
        %889 = vmatpush.msra.mxu0 0.0
        %890 = vmatpush.msra.mxu0 0.0
        %891 = vmatpush.msra.mxu0 0.0
        %892 = vmatpush.msra.mxu0 0.0
        %893 = vmatpush.msra.mxu0 0.0
        %894 = vmatpush.msra.mxu0 0.0
        %895 = vmatpush.msra.mxu0 0.0
        %896 = vmatpush.msra.mxu0 0.0
        %897 = vmatpush.msra.mxu0 0.0
        %898 = vmatpush.msra.mxu0 0.0
        %899 = vmatpush.msra.mxu0 %v781
        %900 = vmatmul.f32.gmra.mxu0 %v882
        %v901 = vpop.f32.mrf.mxu0
        %v902 = vadd.f32 0.0, %v901
        %903 = vdwg.mxu0
        %s904 = scalar_lea.vmem %s633, 32
        %v905 = vld [vmem:[%s904] sm:$0xff]
        %v906 = vld [vmem:[%s904 + $0x8] sm:$0xff]
        %v907 = vld [vmem:[%s904 + $0x10] sm:$0xff]
        %v908 = vld [vmem:[%s904 + $0x18] sm:$0xff]
        %s909 = scalar_lea.vmem %s638, 32
        %v910 = vld [vmem:[%s909] sm:$0xff]
        %v911 = vld [vmem:[%s909 + $0x8] sm:$0xff]
        %v912 = vld [vmem:[%s909 + $0x10] sm:$0xff]
        %v913 = vld [vmem:[%s909 + $0x18] sm:$0xff]
        %s914 = scalar_lea.vmem %s643, 32
        %v915 = vld [vmem:[%s914] sm:$0xff]
        %v916 = vld [vmem:[%s914 + $0x8] sm:$0xff]
        %v917 = vld [vmem:[%s914 + $0x10] sm:$0xff]
        %v918 = vld [vmem:[%s914 + $0x18] sm:$0xff]
        %s919 = scalar_lea.vmem %s648, 8
        %v920 = vld [vmem:[%s919] sm:$0xff]
        %921 = vmatpush.msra.mxu0 0.0
        %922 = vmatpush.msra.mxu0 0.0
        %923 = vmatpush.msra.mxu0 0.0
        %924 = vmatpush.msra.mxu0 0.0
        %925 = vmatpush.msra.mxu0 0.0
        %926 = vmatpush.msra.mxu0 0.0
        %927 = vmatpush.msra.mxu0 0.0
        %928 = vmatpush.msra.mxu0 0.0
        %929 = vmatpush.msra.mxu0 0.0
        %930 = vmatpush.msra.mxu0 0.0
        %931 = vmatpush.msra.mxu0 0.0
        %932 = vmatpush.msra.mxu0 0.0
        %933 = vmatpush.msra.mxu0 %v908
        %934 = vmatpush.msra.mxu0 %v907
        %935 = vmatpush.msra.mxu0 %v906
        %936 = vmatpush.msra.mxu0 %v905
        %937 = vmatmul.f32.gmra.mxu0 %v709
        %v938 = vpop.f32.mrf.mxu0
        %v939 = vadd.f32 0.0, %v938
        %940 = vmatmul.f32.gmra.mxu0 %v712
        %v941 = vpop.f32.mrf.mxu0
        %v942 = vadd.f32 0.0, %v941
        %943 = vdwg.mxu0
        %944 = vmatpush.msra.mxu0 0.0
        %945 = vmatpush.msra.mxu0 0.0
        %946 = vmatpush.msra.mxu0 0.0
        %947 = vmatpush.msra.mxu0 0.0
        %948 = vmatpush.msra.mxu0 0.0
        %949 = vmatpush.msra.mxu0 0.0
        %950 = vmatpush.msra.mxu0 0.0
        %951 = vmatpush.msra.mxu0 0.0
        %952 = vmatpush.msra.mxu0 0.0
        %953 = vmatpush.msra.mxu0 0.0
        %954 = vmatpush.msra.mxu0 0.0
        %955 = vmatpush.msra.mxu0 0.0
        %956 = vmatpush.msra.mxu0 %v913
        %957 = vmatpush.msra.mxu0 %v912
        %958 = vmatpush.msra.mxu0 %v911
        %959 = vmatpush.msra.mxu0 %v910
        %960 = vmatmul.f32.gmra.mxu0 %v709
        %v961 = vpop.f32.mrf.mxu0
        %v962 = vadd.f32 0.0, %v961
        %963 = vmatmul.f32.gmra.mxu0 %v712
        %v964 = vpop.f32.mrf.mxu0
        %v965 = vadd.f32 0.0, %v964
        %966 = vdwg.mxu0
        %967 = vmatpush.msra.mxu0 0.0
        %968 = vmatpush.msra.mxu0 0.0
        %969 = vmatpush.msra.mxu0 0.0
        %970 = vmatpush.msra.mxu0 0.0
        %971 = vmatpush.msra.mxu0 0.0
        %972 = vmatpush.msra.mxu0 0.0
        %973 = vmatpush.msra.mxu0 0.0
        %974 = vmatpush.msra.mxu0 0.0
        %975 = vmatpush.msra.mxu0 0.0
        %976 = vmatpush.msra.mxu0 0.0
        %977 = vmatpush.msra.mxu0 0.0
        %978 = vmatpush.msra.mxu0 0.0
        %979 = vmatpush.msra.mxu0 %v918
        %980 = vmatpush.msra.mxu0 %v917
        %981 = vmatpush.msra.mxu0 %v916
        %982 = vmatpush.msra.mxu0 %v915
        %983 = vmatmul.f32.gmra.mxu0 %v709
        %v984 = vpop.f32.mrf.mxu0
        %v985 = vadd.f32 0.0, %v984
        %986 = vmatmul.f32.gmra.mxu0 %v712
        %v987 = vpop.f32.mrf.mxu0
        %v988 = vadd.f32 0.0, %v987
        %989 = vdwg.mxu0
        %v991 = vsel %vm783, %v939, 0
        %v994 = vsel %vm783, %v962, 0
        %996 = vmatpush.xpose.msra.mxu0 0.0
        %997 = vmatpush.xpose.msra.mxu0 0.0
        %998 = vmatpush.xpose.msra.mxu0 0.0
        %999 = vmatpush.xpose.msra.mxu0 0.0
        %1000 = vmatpush.xpose.msra.mxu0 0.0
        %1001 = vmatpush.xpose.msra.mxu0 0.0
        %1002 = vmatpush.xpose.msra.mxu0 0.0
        %1003 = vmatpush.xpose.msra.mxu0 0.0
        %1004 = vmatpush.xpose.msra.mxu0 0.0
        %1005 = vmatpush.xpose.msra.mxu0 0.0
        %1006 = vmatpush.xpose.msra.mxu0 0.0
        %1007 = vmatpush.xpose.msra.mxu0 0.0
        %1008 = vmatpush.xpose.msra.mxu0 0.0
        %1009 = vmatpush.xpose.msra.mxu0 0.0
        %1010 = vmatpush.xpose.msra.mxu0 0.0
        %1011 = vmatpush.xpose.msra.mxu0 %v994
        %1012 = vmatmul.f32.gmra.mxu0 %v991
        %v1013 = vpop.f32.mrf.mxu0
        %v1014 = vadd.f32 %v689, %v1013
        %1015 = vdwg.mxu0
        %v1017 = vsel %vm783, %v942, 0
        %v1020 = vsel %vm783, %v965, 0
        %1022 = vmatpush.xpose.msra.mxu0 0.0
        %1023 = vmatpush.xpose.msra.mxu0 0.0
        %1024 = vmatpush.xpose.msra.mxu0 0.0
        %1025 = vmatpush.xpose.msra.mxu0 0.0
        %1026 = vmatpush.xpose.msra.mxu0 0.0
        %1027 = vmatpush.xpose.msra.mxu0 0.0
        %1028 = vmatpush.xpose.msra.mxu0 0.0
        %1029 = vmatpush.xpose.msra.mxu0 0.0
        %1030 = vmatpush.xpose.msra.mxu0 0.0
        %1031 = vmatpush.xpose.msra.mxu0 0.0
        %1032 = vmatpush.xpose.msra.mxu0 0.0
        %1033 = vmatpush.xpose.msra.mxu0 0.0
        %1034 = vmatpush.xpose.msra.mxu0 0.0
        %1035 = vmatpush.xpose.msra.mxu0 0.0
        %1036 = vmatpush.xpose.msra.mxu0 0.0
        %1037 = vmatpush.xpose.msra.mxu0 %v1020
        %1038 = vmatmul.f32.gmra.mxu0 %v1017
        %v1039 = vpop.f32.mrf.mxu0
        %v1040 = vadd.f32 %v689, %v1039
        %1041 = vdwg.mxu0
        %v1042 = vsel %vm783, %v1014, -inf
        %1043 = vmax.xlane.f32.xlu0 %v1042
        %v1044 = vpop.xlane.xlu0 %1043
        %v1045 = vsel %vm783, %v1040, -inf
        %1046 = vmax.xlane.f32.xlu0 %v1045
        %v1047 = vpop.xlane.xlu0 %1046
        %v1048 = vsub.f32 %v1014, %v1044
        %v1049 = vsub.f32 %v1040, %v1047
        %v1050 = vmul.f32 %v1048, 1.442695
        %v1051 = vpow.pop %v1050
        %v1052 = vmul.f32 %v1049, 1.442695
        %v1053 = vpow.pop %v1052
        %v1054 = vsel %vm783, %v1051, 0.0
        %1055 = vadd.xlane.f32.xlu0 %v1054
        %v1056 = vpop.xlane.xlu0 %1055
        %v1057 = vsel %vm783, %v1053, 0.0
        %1058 = vadd.xlane.f32.xlu0 %v1057
        %v1059 = vpop.xlane.xlu0 %1058
        %v1060 = vrcp.pop %v1056
        %v1061 = vrcp.pop %v1059
        %v1062 = vmul.f32 %v1051, %v1060
        %v1063 = vmul.f32 %v1053, %v1061
        %v1065 = vsel %vm783, %v1062, 0
        %1067 = vmatpush.msra.mxu0 0.0
        %1068 = vmatpush.msra.mxu0 0.0
        %1069 = vmatpush.msra.mxu0 0.0
        %1070 = vmatpush.msra.mxu0 0.0
        %1071 = vmatpush.msra.mxu0 0.0
        %1072 = vmatpush.msra.mxu0 0.0
        %1073 = vmatpush.msra.mxu0 0.0
        %1074 = vmatpush.msra.mxu0 0.0
        %1075 = vmatpush.msra.mxu0 0.0
        %1076 = vmatpush.msra.mxu0 0.0
        %1077 = vmatpush.msra.mxu0 0.0
        %1078 = vmatpush.msra.mxu0 0.0
        %1079 = vmatpush.msra.mxu0 0.0
        %1080 = vmatpush.msra.mxu0 0.0
        %1081 = vmatpush.msra.mxu0 0.0
        %1082 = vmatpush.msra.mxu0 %v985
        %1083 = vmatmul.f32.gmra.mxu0 %v1065
        %v1084 = vpop.f32.mrf.mxu0
        %v1085 = vadd.f32 0.0, %v1084
        %1086 = vdwg.mxu0
        %v1088 = vsel %vm783, %v1063, 0
        %1090 = vmatpush.msra.mxu0 0.0
        %1091 = vmatpush.msra.mxu0 0.0
        %1092 = vmatpush.msra.mxu0 0.0
        %1093 = vmatpush.msra.mxu0 0.0
        %1094 = vmatpush.msra.mxu0 0.0
        %1095 = vmatpush.msra.mxu0 0.0
        %1096 = vmatpush.msra.mxu0 0.0
        %1097 = vmatpush.msra.mxu0 0.0
        %1098 = vmatpush.msra.mxu0 0.0
        %1099 = vmatpush.msra.mxu0 0.0
        %1100 = vmatpush.msra.mxu0 0.0
        %1101 = vmatpush.msra.mxu0 0.0
        %1102 = vmatpush.msra.mxu0 0.0
        %1103 = vmatpush.msra.mxu0 0.0
        %1104 = vmatpush.msra.mxu0 0.0
        %1105 = vmatpush.msra.mxu0 %v988
        %1106 = vmatmul.f32.gmra.mxu0 %v1088
        %v1107 = vpop.f32.mrf.mxu0
        %v1108 = vadd.f32 0.0, %v1107
        %1109 = vdwg.mxu0
        %v1111 = vsel %vm783, %v1085, 0
        %v1114 = vsel %vm783, %v1108, 0
        %1116 = vmatpush.msra.mxu0 0.0
        %1117 = vmatpush.msra.mxu0 0.0
        %1118 = vmatpush.msra.mxu0 0.0
        %1119 = vmatpush.msra.mxu0 0.0
        %1120 = vmatpush.msra.mxu0 0.0
        %1121 = vmatpush.msra.mxu0 0.0
        %1122 = vmatpush.msra.mxu0 0.0
        %1123 = vmatpush.msra.mxu0 0.0
        %1124 = vmatpush.msra.mxu0 0.0
        %1125 = vmatpush.msra.mxu0 0.0
        %1126 = vmatpush.msra.mxu0 0.0
        %1127 = vmatpush.msra.mxu0 0.0
        %1128 = vmatpush.msra.mxu0 0.0
        %1129 = vmatpush.msra.mxu0 0.0
        %1130 = vmatpush.msra.mxu0 0.0
        %1131 = vmatpush.msra.mxu0 %v920
        %1132 = vmatmul.f32.gmra.mxu0 %v1111
        %v1133 = vpop.f32.mrf.mxu0
        %v1134 = vadd.f32 0.0, %v1133
        %1135 = vmatmul.f32.gmra.mxu0 %v1114
        %v1136 = vpop.f32.mrf.mxu0
        %v1137 = vadd.f32 0.0, %v1136
        %1138 = vdwg.mxu0
        %v1140 = vsel %vm783, %v879, 0
        %v1143 = vsel %vm783, %v902, 0
        %1145 = vmatpush.msra.mxu0 0.0
        %1146 = vmatpush.msra.mxu0 0.0
        %1147 = vmatpush.msra.mxu0 0.0
        %1148 = vmatpush.msra.mxu0 0.0
        %1149 = vmatpush.msra.mxu0 0.0
        %1150 = vmatpush.msra.mxu0 0.0
        %1151 = vmatpush.msra.mxu0 0.0
        %1152 = vmatpush.msra.mxu0 0.0
        %1153 = vmatpush.msra.mxu0 0.0
        %1154 = vmatpush.msra.mxu0 0.0
        %1155 = vmatpush.msra.mxu0 0.0
        %1156 = vmatpush.msra.mxu0 0.0
        %1157 = vmatpush.msra.mxu0 0.0
        %1158 = vmatpush.msra.mxu0 0.0
        %1159 = vmatpush.msra.mxu0 0.0
        %1160 = vmatpush.msra.mxu0 %v706
        %1161 = vmatmul.f32.gmra.mxu0 %v1140
        %v1162 = vpop.f32.mrf.mxu0
        %v1163 = vadd.f32 %v1134, %v1162
        %1164 = vmatmul.f32.gmra.mxu0 %v1143
        %v1165 = vpop.f32.mrf.mxu0
        %v1166 = vadd.f32 %v1137, %v1165
        %1167 = vdwg.mxu0
        %s1168 = scalar_lea.vmem %s633, 64
        %v1169 = vld [vmem:[%s1168] sm:$0xff]
        %v1170 = vld [vmem:[%s1168 + $0x8] sm:$0xff]
        %v1171 = vld [vmem:[%s1168 + $0x10] sm:$0xff]
        %v1172 = vld [vmem:[%s1168 + $0x18] sm:$0xff]
        %s1173 = scalar_lea.vmem %s638, 64
        %v1174 = vld [vmem:[%s1173] sm:$0xff]
        %v1175 = vld [vmem:[%s1173 + $0x8] sm:$0xff]
        %v1176 = vld [vmem:[%s1173 + $0x10] sm:$0xff]
        %v1177 = vld [vmem:[%s1173 + $0x18] sm:$0xff]
        %s1178 = scalar_lea.vmem %s643, 64
        %v1179 = vld [vmem:[%s1178] sm:$0xff]
        %v1180 = vld [vmem:[%s1178 + $0x8] sm:$0xff]
        %v1181 = vld [vmem:[%s1178 + $0x10] sm:$0xff]
        %v1182 = vld [vmem:[%s1178 + $0x18] sm:$0xff]
        %s1183 = scalar_lea.vmem %s648, 16
        %v1184 = vld [vmem:[%s1183] sm:$0xff]
        %1185 = vmatpush.msra.mxu0 0.0
        %1186 = vmatpush.msra.mxu0 0.0
        %1187 = vmatpush.msra.mxu0 0.0
        %1188 = vmatpush.msra.mxu0 0.0
        %1189 = vmatpush.msra.mxu0 0.0
        %1190 = vmatpush.msra.mxu0 0.0
        %1191 = vmatpush.msra.mxu0 0.0
        %1192 = vmatpush.msra.mxu0 0.0
        %1193 = vmatpush.msra.mxu0 0.0
        %1194 = vmatpush.msra.mxu0 0.0
        %1195 = vmatpush.msra.mxu0 0.0
        %1196 = vmatpush.msra.mxu0 0.0
        %1197 = vmatpush.msra.mxu0 %v1172
        %1198 = vmatpush.msra.mxu0 %v1171
        %1199 = vmatpush.msra.mxu0 %v1170
        %1200 = vmatpush.msra.mxu0 %v1169
        %1201 = vmatmul.f32.gmra.mxu0 %v709
        %v1202 = vpop.f32.mrf.mxu0
        %v1203 = vadd.f32 0.0, %v1202
        %1204 = vmatmul.f32.gmra.mxu0 %v712
        %v1205 = vpop.f32.mrf.mxu0
        %v1206 = vadd.f32 0.0, %v1205
        %1207 = vdwg.mxu0
        %1208 = vmatpush.msra.mxu0 0.0
        %1209 = vmatpush.msra.mxu0 0.0
        %1210 = vmatpush.msra.mxu0 0.0
        %1211 = vmatpush.msra.mxu0 0.0
        %1212 = vmatpush.msra.mxu0 0.0
        %1213 = vmatpush.msra.mxu0 0.0
        %1214 = vmatpush.msra.mxu0 0.0
        %1215 = vmatpush.msra.mxu0 0.0
        %1216 = vmatpush.msra.mxu0 0.0
        %1217 = vmatpush.msra.mxu0 0.0
        %1218 = vmatpush.msra.mxu0 0.0
        %1219 = vmatpush.msra.mxu0 0.0
        %1220 = vmatpush.msra.mxu0 %v1177
        %1221 = vmatpush.msra.mxu0 %v1176
        %1222 = vmatpush.msra.mxu0 %v1175
        %1223 = vmatpush.msra.mxu0 %v1174
        %1224 = vmatmul.f32.gmra.mxu0 %v709
        %v1225 = vpop.f32.mrf.mxu0
        %v1226 = vadd.f32 0.0, %v1225
        %1227 = vmatmul.f32.gmra.mxu0 %v712
        %v1228 = vpop.f32.mrf.mxu0
        %v1229 = vadd.f32 0.0, %v1228
        %1230 = vdwg.mxu0
        %1231 = vmatpush.msra.mxu0 0.0
        %1232 = vmatpush.msra.mxu0 0.0
        %1233 = vmatpush.msra.mxu0 0.0
        %1234 = vmatpush.msra.mxu0 0.0
        %1235 = vmatpush.msra.mxu0 0.0
        %1236 = vmatpush.msra.mxu0 0.0
        %1237 = vmatpush.msra.mxu0 0.0
        %1238 = vmatpush.msra.mxu0 0.0
        %1239 = vmatpush.msra.mxu0 0.0
        %1240 = vmatpush.msra.mxu0 0.0
        %1241 = vmatpush.msra.mxu0 0.0
        %1242 = vmatpush.msra.mxu0 0.0
        %1243 = vmatpush.msra.mxu0 %v1182
        %1244 = vmatpush.msra.mxu0 %v1181
        %1245 = vmatpush.msra.mxu0 %v1180
        %1246 = vmatpush.msra.mxu0 %v1179
        %1247 = vmatmul.f32.gmra.mxu0 %v709
        %v1248 = vpop.f32.mrf.mxu0
        %v1249 = vadd.f32 0.0, %v1248
        %1250 = vmatmul.f32.gmra.mxu0 %v712
        %v1251 = vpop.f32.mrf.mxu0
        %v1252 = vadd.f32 0.0, %v1251
        %1253 = vdwg.mxu0
        %v1255 = vsel %vm783, %v1203, 0
        %v1258 = vsel %vm783, %v1226, 0
        %1260 = vmatpush.xpose.msra.mxu0 0.0
        %1261 = vmatpush.xpose.msra.mxu0 0.0
        %1262 = vmatpush.xpose.msra.mxu0 0.0
        %1263 = vmatpush.xpose.msra.mxu0 0.0
        %1264 = vmatpush.xpose.msra.mxu0 0.0
        %1265 = vmatpush.xpose.msra.mxu0 0.0
        %1266 = vmatpush.xpose.msra.mxu0 0.0
        %1267 = vmatpush.xpose.msra.mxu0 0.0
        %1268 = vmatpush.xpose.msra.mxu0 0.0
        %1269 = vmatpush.xpose.msra.mxu0 0.0
        %1270 = vmatpush.xpose.msra.mxu0 0.0
        %1271 = vmatpush.xpose.msra.mxu0 0.0
        %1272 = vmatpush.xpose.msra.mxu0 0.0
        %1273 = vmatpush.xpose.msra.mxu0 0.0
        %1274 = vmatpush.xpose.msra.mxu0 0.0
        %1275 = vmatpush.xpose.msra.mxu0 %v1258
        %1276 = vmatmul.f32.gmra.mxu0 %v1255
        %v1277 = vpop.f32.mrf.mxu0
        %v1278 = vadd.f32 %v689, %v1277
        %1279 = vdwg.mxu0
        %v1281 = vsel %vm783, %v1206, 0
        %v1284 = vsel %vm783, %v1229, 0
        %1286 = vmatpush.xpose.msra.mxu0 0.0
        %1287 = vmatpush.xpose.msra.mxu0 0.0
        %1288 = vmatpush.xpose.msra.mxu0 0.0
        %1289 = vmatpush.xpose.msra.mxu0 0.0
        %1290 = vmatpush.xpose.msra.mxu0 0.0
        %1291 = vmatpush.xpose.msra.mxu0 0.0
        %1292 = vmatpush.xpose.msra.mxu0 0.0
        %1293 = vmatpush.xpose.msra.mxu0 0.0
        %1294 = vmatpush.xpose.msra.mxu0 0.0
        %1295 = vmatpush.xpose.msra.mxu0 0.0
        %1296 = vmatpush.xpose.msra.mxu0 0.0
        %1297 = vmatpush.xpose.msra.mxu0 0.0
        %1298 = vmatpush.xpose.msra.mxu0 0.0
        %1299 = vmatpush.xpose.msra.mxu0 0.0
        %1300 = vmatpush.xpose.msra.mxu0 0.0
        %1301 = vmatpush.xpose.msra.mxu0 %v1284
        %1302 = vmatmul.f32.gmra.mxu0 %v1281
        %v1303 = vpop.f32.mrf.mxu0
        %v1304 = vadd.f32 %v689, %v1303
        %1305 = vdwg.mxu0
        %v1306 = vsel %vm783, %v1278, -inf
        %1307 = vmax.xlane.f32.xlu0 %v1306
        %v1308 = vpop.xlane.xlu0 %1307
        %v1309 = vsel %vm783, %v1304, -inf
        %1310 = vmax.xlane.f32.xlu0 %v1309
        %v1311 = vpop.xlane.xlu0 %1310
        %v1312 = vsub.f32 %v1278, %v1308
        %v1313 = vsub.f32 %v1304, %v1311
        %v1314 = vmul.f32 %v1312, 1.442695
        %v1315 = vpow.pop %v1314
        %v1316 = vmul.f32 %v1313, 1.442695
        %v1317 = vpow.pop %v1316
        %v1318 = vsel %vm783, %v1315, 0.0
        %1319 = vadd.xlane.f32.xlu0 %v1318
        %v1320 = vpop.xlane.xlu0 %1319
        %v1321 = vsel %vm783, %v1317, 0.0
        %1322 = vadd.xlane.f32.xlu0 %v1321
        %v1323 = vpop.xlane.xlu0 %1322
        %v1324 = vrcp.pop %v1320
        %v1325 = vrcp.pop %v1323
        %v1326 = vmul.f32 %v1315, %v1324
        %v1327 = vmul.f32 %v1317, %v1325
        %v1329 = vsel %vm783, %v1326, 0
        %1331 = vmatpush.msra.mxu0 0.0
        %1332 = vmatpush.msra.mxu0 0.0
        %1333 = vmatpush.msra.mxu0 0.0
        %1334 = vmatpush.msra.mxu0 0.0
        %1335 = vmatpush.msra.mxu0 0.0
        %1336 = vmatpush.msra.mxu0 0.0
        %1337 = vmatpush.msra.mxu0 0.0
        %1338 = vmatpush.msra.mxu0 0.0
        %1339 = vmatpush.msra.mxu0 0.0
        %1340 = vmatpush.msra.mxu0 0.0
        %1341 = vmatpush.msra.mxu0 0.0
        %1342 = vmatpush.msra.mxu0 0.0
        %1343 = vmatpush.msra.mxu0 0.0
        %1344 = vmatpush.msra.mxu0 0.0
        %1345 = vmatpush.msra.mxu0 0.0
        %1346 = vmatpush.msra.mxu0 %v1249
        %1347 = vmatmul.f32.gmra.mxu0 %v1329
        %v1348 = vpop.f32.mrf.mxu0
        %v1349 = vadd.f32 0.0, %v1348
        %1350 = vdwg.mxu0
        %v1352 = vsel %vm783, %v1327, 0
        %1354 = vmatpush.msra.mxu0 0.0
        %1355 = vmatpush.msra.mxu0 0.0
        %1356 = vmatpush.msra.mxu0 0.0
        %1357 = vmatpush.msra.mxu0 0.0
        %1358 = vmatpush.msra.mxu0 0.0
        %1359 = vmatpush.msra.mxu0 0.0
        %1360 = vmatpush.msra.mxu0 0.0
        %1361 = vmatpush.msra.mxu0 0.0
        %1362 = vmatpush.msra.mxu0 0.0
        %1363 = vmatpush.msra.mxu0 0.0
        %1364 = vmatpush.msra.mxu0 0.0
        %1365 = vmatpush.msra.mxu0 0.0
        %1366 = vmatpush.msra.mxu0 0.0
        %1367 = vmatpush.msra.mxu0 0.0
        %1368 = vmatpush.msra.mxu0 0.0
        %1369 = vmatpush.msra.mxu0 %v1252
        %1370 = vmatmul.f32.gmra.mxu0 %v1352
        %v1371 = vpop.f32.mrf.mxu0
        %v1372 = vadd.f32 0.0, %v1371
        %1373 = vdwg.mxu0
        %v1375 = vsel %vm783, %v1349, 0
        %v1378 = vsel %vm783, %v1372, 0
        %1380 = vmatpush.msra.mxu0 0.0
        %1381 = vmatpush.msra.mxu0 0.0
        %1382 = vmatpush.msra.mxu0 0.0
        %1383 = vmatpush.msra.mxu0 0.0
        %1384 = vmatpush.msra.mxu0 0.0
        %1385 = vmatpush.msra.mxu0 0.0
        %1386 = vmatpush.msra.mxu0 0.0
        %1387 = vmatpush.msra.mxu0 0.0
        %1388 = vmatpush.msra.mxu0 0.0
        %1389 = vmatpush.msra.mxu0 0.0
        %1390 = vmatpush.msra.mxu0 0.0
        %1391 = vmatpush.msra.mxu0 0.0
        %1392 = vmatpush.msra.mxu0 0.0
        %1393 = vmatpush.msra.mxu0 0.0
        %1394 = vmatpush.msra.mxu0 0.0
        %1395 = vmatpush.msra.mxu0 %v1184
        %1396 = vmatmul.f32.gmra.mxu0 %v1375
        %v1397 = vpop.f32.mrf.mxu0
        %v1398 = vadd.f32 0.0, %v1397
        %1399 = vmatmul.f32.gmra.mxu0 %v1378
        %v1400 = vpop.f32.mrf.mxu0
        %v1401 = vadd.f32 0.0, %v1400
        %1402 = vdwg.mxu0
        %v1403 = vadd.f32 %v1163, %v1398
        %v1404 = vadd.f32 %v1166, %v1401
        %s1405 = scalar_lea.vmem %s633, 96
        %v1406 = vld [vmem:[%s1405] sm:$0xff]
        %v1407 = vld [vmem:[%s1405 + $0x8] sm:$0xff]
        %v1408 = vld [vmem:[%s1405 + $0x10] sm:$0xff]
        %v1409 = vld [vmem:[%s1405 + $0x18] sm:$0xff]
        %s1410 = scalar_lea.vmem %s638, 96
        %v1411 = vld [vmem:[%s1410] sm:$0xff]
        %v1412 = vld [vmem:[%s1410 + $0x8] sm:$0xff]
        %v1413 = vld [vmem:[%s1410 + $0x10] sm:$0xff]
        %v1414 = vld [vmem:[%s1410 + $0x18] sm:$0xff]
        %s1415 = scalar_lea.vmem %s643, 96
        %v1416 = vld [vmem:[%s1415] sm:$0xff]
        %v1417 = vld [vmem:[%s1415 + $0x8] sm:$0xff]
        %v1418 = vld [vmem:[%s1415 + $0x10] sm:$0xff]
        %v1419 = vld [vmem:[%s1415 + $0x18] sm:$0xff]
        %s1420 = scalar_lea.vmem %s648, 24
        %v1421 = vld [vmem:[%s1420] sm:$0xff]
        %1422 = vmatpush.msra.mxu0 0.0
        %1423 = vmatpush.msra.mxu0 0.0
        %1424 = vmatpush.msra.mxu0 0.0
        %1425 = vmatpush.msra.mxu0 0.0
        %1426 = vmatpush.msra.mxu0 0.0
        %1427 = vmatpush.msra.mxu0 0.0
        %1428 = vmatpush.msra.mxu0 0.0
        %1429 = vmatpush.msra.mxu0 0.0
        %1430 = vmatpush.msra.mxu0 0.0
        %1431 = vmatpush.msra.mxu0 0.0
        %1432 = vmatpush.msra.mxu0 0.0
        %1433 = vmatpush.msra.mxu0 0.0
        %1434 = vmatpush.msra.mxu0 %v1409
        %1435 = vmatpush.msra.mxu0 %v1408
        %1436 = vmatpush.msra.mxu0 %v1407
        %1437 = vmatpush.msra.mxu0 %v1406
        %1438 = vmatmul.f32.gmra.mxu0 %v709
        %v1439 = vpop.f32.mrf.mxu0
        %v1440 = vadd.f32 0.0, %v1439
        %1441 = vmatmul.f32.gmra.mxu0 %v712
        %v1442 = vpop.f32.mrf.mxu0
        %v1443 = vadd.f32 0.0, %v1442
        %1444 = vdwg.mxu0
        %1445 = vmatpush.msra.mxu0 0.0
        %1446 = vmatpush.msra.mxu0 0.0
        %1447 = vmatpush.msra.mxu0 0.0
        %1448 = vmatpush.msra.mxu0 0.0
        %1449 = vmatpush.msra.mxu0 0.0
        %1450 = vmatpush.msra.mxu0 0.0
        %1451 = vmatpush.msra.mxu0 0.0
        %1452 = vmatpush.msra.mxu0 0.0
        %1453 = vmatpush.msra.mxu0 0.0
        %1454 = vmatpush.msra.mxu0 0.0
        %1455 = vmatpush.msra.mxu0 0.0
        %1456 = vmatpush.msra.mxu0 0.0
        %1457 = vmatpush.msra.mxu0 %v1414
        %1458 = vmatpush.msra.mxu0 %v1413
        %1459 = vmatpush.msra.mxu0 %v1412
        %1460 = vmatpush.msra.mxu0 %v1411
        %1461 = vmatmul.f32.gmra.mxu0 %v709
        %v1462 = vpop.f32.mrf.mxu0
        %v1463 = vadd.f32 0.0, %v1462
        %1464 = vmatmul.f32.gmra.mxu0 %v712
        %v1465 = vpop.f32.mrf.mxu0
        %v1466 = vadd.f32 0.0, %v1465
        %1467 = vdwg.mxu0
        %1468 = vmatpush.msra.mxu0 0.0
        %1469 = vmatpush.msra.mxu0 0.0
        %1470 = vmatpush.msra.mxu0 0.0
        %1471 = vmatpush.msra.mxu0 0.0
        %1472 = vmatpush.msra.mxu0 0.0
        %1473 = vmatpush.msra.mxu0 0.0
        %1474 = vmatpush.msra.mxu0 0.0
        %1475 = vmatpush.msra.mxu0 0.0
        %1476 = vmatpush.msra.mxu0 0.0
        %1477 = vmatpush.msra.mxu0 0.0
        %1478 = vmatpush.msra.mxu0 0.0
        %1479 = vmatpush.msra.mxu0 0.0
        %1480 = vmatpush.msra.mxu0 %v1419
        %1481 = vmatpush.msra.mxu0 %v1418
        %1482 = vmatpush.msra.mxu0 %v1417
        %1483 = vmatpush.msra.mxu0 %v1416
        %1484 = vmatmul.f32.gmra.mxu0 %v709
        %v1485 = vpop.f32.mrf.mxu0
        %v1486 = vadd.f32 0.0, %v1485
        %1487 = vmatmul.f32.gmra.mxu0 %v712
        %v1488 = vpop.f32.mrf.mxu0
        %v1489 = vadd.f32 0.0, %v1488
        %1490 = vdwg.mxu0
        %v1492 = vsel %vm783, %v1440, 0
        %v1495 = vsel %vm783, %v1463, 0
        %1497 = vmatpush.xpose.msra.mxu0 0.0
        %1498 = vmatpush.xpose.msra.mxu0 0.0
        %1499 = vmatpush.xpose.msra.mxu0 0.0
        %1500 = vmatpush.xpose.msra.mxu0 0.0
        %1501 = vmatpush.xpose.msra.mxu0 0.0
        %1502 = vmatpush.xpose.msra.mxu0 0.0
        %1503 = vmatpush.xpose.msra.mxu0 0.0
        %1504 = vmatpush.xpose.msra.mxu0 0.0
        %1505 = vmatpush.xpose.msra.mxu0 0.0
        %1506 = vmatpush.xpose.msra.mxu0 0.0
        %1507 = vmatpush.xpose.msra.mxu0 0.0
        %1508 = vmatpush.xpose.msra.mxu0 0.0
        %1509 = vmatpush.xpose.msra.mxu0 0.0
        %1510 = vmatpush.xpose.msra.mxu0 0.0
        %1511 = vmatpush.xpose.msra.mxu0 0.0
        %1512 = vmatpush.xpose.msra.mxu0 %v1495
        %1513 = vmatmul.f32.gmra.mxu0 %v1492
        %v1514 = vpop.f32.mrf.mxu0
        %v1515 = vadd.f32 %v689, %v1514
        %1516 = vdwg.mxu0
        %v1518 = vsel %vm783, %v1443, 0
        %v1521 = vsel %vm783, %v1466, 0
        %1523 = vmatpush.xpose.msra.mxu0 0.0
        %1524 = vmatpush.xpose.msra.mxu0 0.0
        %1525 = vmatpush.xpose.msra.mxu0 0.0
        %1526 = vmatpush.xpose.msra.mxu0 0.0
        %1527 = vmatpush.xpose.msra.mxu0 0.0
        %1528 = vmatpush.xpose.msra.mxu0 0.0
        %1529 = vmatpush.xpose.msra.mxu0 0.0
        %1530 = vmatpush.xpose.msra.mxu0 0.0
        %1531 = vmatpush.xpose.msra.mxu0 0.0
        %1532 = vmatpush.xpose.msra.mxu0 0.0
        %1533 = vmatpush.xpose.msra.mxu0 0.0
        %1534 = vmatpush.xpose.msra.mxu0 0.0
        %1535 = vmatpush.xpose.msra.mxu0 0.0
        %1536 = vmatpush.xpose.msra.mxu0 0.0
        %1537 = vmatpush.xpose.msra.mxu0 0.0
        %1538 = vmatpush.xpose.msra.mxu0 %v1521
        %1539 = vmatmul.f32.gmra.mxu0 %v1518
        %v1540 = vpop.f32.mrf.mxu0
        %v1541 = vadd.f32 %v689, %v1540
        %1542 = vdwg.mxu0
        %v1543 = vsel %vm783, %v1515, -inf
        %1544 = vmax.xlane.f32.xlu0 %v1543
        %v1545 = vpop.xlane.xlu0 %1544
        %v1546 = vsel %vm783, %v1541, -inf
        %1547 = vmax.xlane.f32.xlu0 %v1546
        %v1548 = vpop.xlane.xlu0 %1547
        %v1549 = vsub.f32 %v1515, %v1545
        %v1550 = vsub.f32 %v1541, %v1548
        %v1551 = vmul.f32 %v1549, 1.442695
        %v1552 = vpow.pop %v1551
        %v1553 = vmul.f32 %v1550, 1.442695
        %v1554 = vpow.pop %v1553
        %v1555 = vsel %vm783, %v1552, 0.0
        %1556 = vadd.xlane.f32.xlu0 %v1555
        %v1557 = vpop.xlane.xlu0 %1556
        %v1558 = vsel %vm783, %v1554, 0.0
        %1559 = vadd.xlane.f32.xlu0 %v1558
        %v1560 = vpop.xlane.xlu0 %1559
        %v1561 = vrcp.pop %v1557
        %v1562 = vrcp.pop %v1560
        %v1563 = vmul.f32 %v1552, %v1561
        %v1564 = vmul.f32 %v1554, %v1562
        %v1566 = vsel %vm783, %v1563, 0
        %1568 = vmatpush.msra.mxu0 0.0
        %1569 = vmatpush.msra.mxu0 0.0
        %1570 = vmatpush.msra.mxu0 0.0
        %1571 = vmatpush.msra.mxu0 0.0
        %1572 = vmatpush.msra.mxu0 0.0
        %1573 = vmatpush.msra.mxu0 0.0
        %1574 = vmatpush.msra.mxu0 0.0
        %1575 = vmatpush.msra.mxu0 0.0
        %1576 = vmatpush.msra.mxu0 0.0
        %1577 = vmatpush.msra.mxu0 0.0
        %1578 = vmatpush.msra.mxu0 0.0
        %1579 = vmatpush.msra.mxu0 0.0
        %1580 = vmatpush.msra.mxu0 0.0
        %1581 = vmatpush.msra.mxu0 0.0
        %1582 = vmatpush.msra.mxu0 0.0
        %1583 = vmatpush.msra.mxu0 %v1486
        %1584 = vmatmul.f32.gmra.mxu0 %v1566
        %v1585 = vpop.f32.mrf.mxu0
        %v1586 = vadd.f32 0.0, %v1585
        %1587 = vdwg.mxu0
        %v1589 = vsel %vm783, %v1564, 0
        %1591 = vmatpush.msra.mxu0 0.0
        %1592 = vmatpush.msra.mxu0 0.0
        %1593 = vmatpush.msra.mxu0 0.0
        %1594 = vmatpush.msra.mxu0 0.0
        %1595 = vmatpush.msra.mxu0 0.0
        %1596 = vmatpush.msra.mxu0 0.0
        %1597 = vmatpush.msra.mxu0 0.0
        %1598 = vmatpush.msra.mxu0 0.0
        %1599 = vmatpush.msra.mxu0 0.0
        %1600 = vmatpush.msra.mxu0 0.0
        %1601 = vmatpush.msra.mxu0 0.0
        %1602 = vmatpush.msra.mxu0 0.0
        %1603 = vmatpush.msra.mxu0 0.0
        %1604 = vmatpush.msra.mxu0 0.0
        %1605 = vmatpush.msra.mxu0 0.0
        %1606 = vmatpush.msra.mxu0 %v1489
        %1607 = vmatmul.f32.gmra.mxu0 %v1589
        %v1608 = vpop.f32.mrf.mxu0
        %v1609 = vadd.f32 0.0, %v1608
        %1610 = vdwg.mxu0
        %v1612 = vsel %vm783, %v1586, 0
        %v1615 = vsel %vm783, %v1609, 0
        %1617 = vmatpush.msra.mxu0 0.0
        %1618 = vmatpush.msra.mxu0 0.0
        %1619 = vmatpush.msra.mxu0 0.0
        %1620 = vmatpush.msra.mxu0 0.0
        %1621 = vmatpush.msra.mxu0 0.0
        %1622 = vmatpush.msra.mxu0 0.0
        %1623 = vmatpush.msra.mxu0 0.0
        %1624 = vmatpush.msra.mxu0 0.0
        %1625 = vmatpush.msra.mxu0 0.0
        %1626 = vmatpush.msra.mxu0 0.0
        %1627 = vmatpush.msra.mxu0 0.0
        %1628 = vmatpush.msra.mxu0 0.0
        %1629 = vmatpush.msra.mxu0 0.0
        %1630 = vmatpush.msra.mxu0 0.0
        %1631 = vmatpush.msra.mxu0 0.0
        %1632 = vmatpush.msra.mxu0 %v1421
        %1633 = vmatmul.f32.gmra.mxu0 %v1612
        %v1634 = vpop.f32.mrf.mxu0
        %v1635 = vadd.f32 0.0, %v1634
        %1636 = vmatmul.f32.gmra.mxu0 %v1615
        %v1637 = vpop.f32.mrf.mxu0
        %v1638 = vadd.f32 0.0, %v1637
        %1639 = vdwg.mxu0
        %v1640 = vadd.f32 %v1403, %v1635
        %v1641 = vadd.f32 %v1404, %v1638
        %v1642 = vadd.f32 %v1640, %v687
        %v1643 = vadd.f32 %v1641, %v688
        %v1644 = vsel %vm707, %v1642, 0.0
        %1645 = vadd.xlane.f32.xlu0 %v1644
        %v1646 = vpop.xlane.xlu0 %1645
        %v1647 = vsel %vm707, %v1643, 0.0
        %1648 = vadd.xlane.f32.xlu0 %v1647
        %v1649 = vpop.xlane.xlu0 %1648
        %v1650 = vrcp.pop 32.0
        %v1651 = vmul.f32 32.0, %v1650
        %v1652 = vsub.f32 1.0, %v1651
        %v1653 = vmul.f32 %v1650, %v1652
        %v1654 = vadd.f32 %v1650, %v1653
        %vm1655 = vweird.f32 %v1650
        %v1656 = vsel %vm1655, %v1650, %v1654
        %v1657 = vmul.f32 %v1646, %v1656
        %v1658 = vmul.f32 %v1649, %v1656
        %v1659 = vsub.f32 %v1642, %v1657
        %v1660 = vsub.f32 %v1643, %v1658
        %v1661 = vmul.f32 %v1659, %v1659
        %v1662 = vmul.f32 %v1660, %v1660
        %v1663 = vsel %vm707, %v1661, 0.0
        %1664 = vadd.xlane.f32.xlu0 %v1663
        %v1665 = vpop.xlane.xlu0 %1664
        %v1666 = vsel %vm707, %v1662, 0.0
        %1667 = vadd.xlane.f32.xlu0 %v1666
        %v1668 = vpop.xlane.xlu0 %1667
        %v1669 = vmul.f32 %v1665, %v1656
        %v1670 = vmul.f32 %v1668, %v1656
        %v1671 = vadd.f32 %v1669, 1e-05
        %v1672 = vadd.f32 %v1670, 1e-05
        %v1673 = vrsqrt.pop %v1671
        %v1674 = vmul.f32 %v1673, %v1671
        %v1675 = vmul.f32 %v1674, %v1673
        %v1676 = vmul.f32 0.5, %v1675
        %v1677 = vsub.f32 1.5, %v1676
        %v1678 = vmul.f32 %v1673, %v1677
        %vm1679 = vweird.f32 %v1671
        %vm1680 = vweird.f32 %v1673
        %vm1681 = vmor %vm1679, %vm1680
        %v1682 = vsel %vm1681, %v1673, %v1678
        %v1683 = vrsqrt.pop %v1672
        %v1684 = vmul.f32 %v1683, %v1672
        %v1685 = vmul.f32 %v1684, %v1683
        %v1686 = vmul.f32 0.5, %v1685
        %v1687 = vsub.f32 1.5, %v1686
        %v1688 = vmul.f32 %v1683, %v1687
        %vm1689 = vweird.f32 %v1672
        %vm1690 = vweird.f32 %v1683
        %vm1691 = vmor %vm1689, %vm1690
        %v1692 = vsel %vm1691, %v1683, %v1688
        %v1693 = vmul.f32 %v1659, %v1682
        %v1694 = vmul.f32 %v1660, %v1692
        %v1696 = vperm.slane %v690, 0
        %v1698 = vmul.f32 %v1693, %v1696
        %v1699 = vmul.f32 %v1694, %v1696
        %v1701 = vperm.slane %v691, 0
        %v1703 = vadd.f32 %v1698, %v1701
        %v1704 = vadd.f32 %v1699, %v1701
        %v1705 = vld [vmem:[%s659] sm:$0xff]
        %v1706 = vld [vmem:[%s659 + $0x8] sm:$0xff]
        %v1707 = vld [vmem:[%s659 + $0x10] sm:$0xff]
        %v1708 = vld [vmem:[%s659 + $0x18] sm:$0xff]
        %v1709 = vld [vmem:[%s662] sm:$0x1]
        %v1711 = vperm.slane %v1709, 0
        %v1714 = vsel %vm707, %v1703, 0
        %v1717 = vsel %vm707, %v1704, 0
        %1719 = vmatpush.msra.mxu0 0.0
        %1720 = vmatpush.msra.mxu0 0.0
        %1721 = vmatpush.msra.mxu0 0.0
        %1722 = vmatpush.msra.mxu0 0.0
        %1723 = vmatpush.msra.mxu0 0.0
        %1724 = vmatpush.msra.mxu0 0.0
        %1725 = vmatpush.msra.mxu0 0.0
        %1726 = vmatpush.msra.mxu0 0.0
        %1727 = vmatpush.msra.mxu0 0.0
        %1728 = vmatpush.msra.mxu0 0.0
        %1729 = vmatpush.msra.mxu0 0.0
        %1730 = vmatpush.msra.mxu0 0.0
        %1731 = vmatpush.msra.mxu0 %v1708
        %1732 = vmatpush.msra.mxu0 %v1707
        %1733 = vmatpush.msra.mxu0 %v1706
        %1734 = vmatpush.msra.mxu0 %v1705
        %1735 = vmatmul.f32.gmra.mxu0 %v1714
        %v1736 = vpop.f32.mrf.mxu0
        %v1737 = vadd.f32 %v1711, %v1736
        %1738 = vmatmul.f32.gmra.mxu0 %v1717
        %v1739 = vpop.f32.mrf.mxu0
        %v1740 = vadd.f32 %v1711, %v1739
        %1741 = vdwg.mxu0
        %v1742 = vld [vmem:[%s667] sm:$0xff]
        %v1743 = vld [vmem:[%s667 + $0x8] sm:$0xff]
        %v1744 = vld [vmem:[%s667 + $0x10] sm:$0xff]
        %v1745 = vld [vmem:[%s667 + $0x18] sm:$0xff]
        %v1746 = vld [vmem:[%s667 + $0x20] sm:$0xff]
        %v1747 = vld [vmem:[%s667 + $0x28] sm:$0xff]
        %v1748 = vld [vmem:[%s667 + $0x30] sm:$0xff]
        %v1749 = vld [vmem:[%s667 + $0x38] sm:$0xff]
        %v1750 = vld [vmem:[%s670] sm:$0x1]
        %v1752 = vperm.slane %v1750, 0
        %vm1754 = vcmask 523264
        %v1756 = vsel %vm1754, %v1737, 0
        %v1759 = vsel %vm1754, %v1740, 0
        %1761 = vmatpush.msra.mxu0 0.0
        %1762 = vmatpush.msra.mxu0 0.0
        %1763 = vmatpush.msra.mxu0 0.0
        %1764 = vmatpush.msra.mxu0 0.0
        %1765 = vmatpush.msra.mxu0 0.0
        %1766 = vmatpush.msra.mxu0 0.0
        %1767 = vmatpush.msra.mxu0 0.0
        %1768 = vmatpush.msra.mxu0 0.0
        %1769 = vmatpush.msra.mxu0 %v1749
        %1770 = vmatpush.msra.mxu0 %v1748
        %1771 = vmatpush.msra.mxu0 %v1747
        %1772 = vmatpush.msra.mxu0 %v1746
        %1773 = vmatpush.msra.mxu0 %v1745
        %1774 = vmatpush.msra.mxu0 %v1744
        %1775 = vmatpush.msra.mxu0 %v1743
        %1776 = vmatpush.msra.mxu0 %v1742
        %1777 = vmatmul.f32.gmra.mxu0 %v1756
        %v1778 = vpop.f32.mrf.mxu0
        %v1779 = vadd.f32 %v1752, %v1778
        %1780 = vmatmul.f32.gmra.mxu0 %v1759
        %v1781 = vpop.f32.mrf.mxu0
        %v1782 = vadd.f32 %v1752, %v1781
        %1783 = vdwg.mxu0
        %v1784 = vmax.f32 %v1779, 0.0
        %v1785 = vmax.f32 %v1782, 0.0
        %v1786 = vadd.f32 %v1784, %v1703
        %v1787 = vadd.f32 %v1785, %v1704
        %v1788 = vsel %vm707, %v1786, 0.0
        %1789 = vadd.xlane.f32.xlu0 %v1788
        %v1790 = vpop.xlane.xlu0 %1789
        %v1791 = vsel %vm707, %v1787, 0.0
        %1792 = vadd.xlane.f32.xlu0 %v1791
        %v1793 = vpop.xlane.xlu0 %1792
        %v1794 = vmul.f32 %v1790, %v1656
        %v1795 = vmul.f32 %v1793, %v1656
        %v1796 = vsub.f32 %v1786, %v1794
        %v1797 = vsub.f32 %v1787, %v1795
        %v1798 = vmul.f32 %v1796, %v1796
        %v1799 = vmul.f32 %v1797, %v1797
        %v1800 = vsel %vm707, %v1798, 0.0
        %1801 = vadd.xlane.f32.xlu0 %v1800
        %v1802 = vpop.xlane.xlu0 %1801
        %v1803 = vsel %vm707, %v1799, 0.0
        %1804 = vadd.xlane.f32.xlu0 %v1803
        %v1805 = vpop.xlane.xlu0 %1804
        %v1806 = vmul.f32 %v1802, %v1656
        %v1807 = vmul.f32 %v1805, %v1656
        %v1808 = vadd.f32 %v1806, 1e-05
        %v1809 = vadd.f32 %v1807, 1e-05
        %v1810 = vrsqrt.pop %v1808
        %v1811 = vmul.f32 %v1810, %v1808
        %v1812 = vmul.f32 %v1811, %v1810
        %v1813 = vmul.f32 0.5, %v1812
        %v1814 = vsub.f32 1.5, %v1813
        %v1815 = vmul.f32 %v1810, %v1814
        %vm1816 = vweird.f32 %v1808
        %vm1817 = vweird.f32 %v1810
        %vm1818 = vmor %vm1816, %vm1817
        %v1819 = vsel %vm1818, %v1810, %v1815
        %v1820 = vrsqrt.pop %v1809
        %v1821 = vmul.f32 %v1820, %v1809
        %v1822 = vmul.f32 %v1821, %v1820
        %v1823 = vmul.f32 0.5, %v1822
        %v1824 = vsub.f32 1.5, %v1823
        %v1825 = vmul.f32 %v1820, %v1824
        %vm1826 = vweird.f32 %v1809
        %vm1827 = vweird.f32 %v1820
        %vm1828 = vmor %vm1826, %vm1827
        %v1829 = vsel %vm1828, %v1820, %v1825
        %v1830 = vmul.f32 %v1796, %v1819
        %v1831 = vmul.f32 %v1797, %v1829
        %v1833 = vperm.slane %v692, 0
        %v1835 = vmul.f32 %v1830, %v1833
        %v1836 = vmul.f32 %v1831, %v1833
        %v1838 = vperm.slane %v693, 0
        %v1840 = vadd.f32 %v1835, %v1838
        %v1841 = vadd.f32 %v1836, %v1838
        %1842 = vst.msk [vmem:[#allocation2] sm:$0xff] %vm707, %v1840
        %1843 = vst.msk [vmem:[#allocation2 + $0x8] sm:$0xff] %vm707, %v1841
        // Predicated region
        $region81: #{tpu_custom_call.1} parent=75 // pred_check
          %p1844 = pneg %p415
        $region82: #{tpu_custom_call.1} parent=75 // pred_check_branch
          %1846 = sbr.rel (%p1844) target = $region84
        $region83: #{tpu_custom_call.1} parent=75 // pred_region
          %s1847 = smul.u32 2, %s30
          %1849 = vsyncadd [#allocation3], 0
          %s1850 = smul.addr %s1847, 8
          %s1851 = scalar_lea.hbm %s14, %s1850
          %s1852 = sshll.u32 [#allocation2], 4
          %s1853 = int_to_ptr.vmem [resolvable:$true] %s1852
          %s1854 = sshll.u32 %s1851, 4
          %s1855 = int_to_ptr.hbm [resolvable:$true] %s1854
          %1860 = dma.vmem_to_hbm [thread:$0]  %s1853, 256, %s1855, [#allocation3], 128, 128, 8
        $region84: #{tpu_custom_call.1} parent=75 // pred_fallthru
          _
        // Predicated region
        $region85: #{tpu_custom_call.1} parent=75 // pred_check
          %p1861 = pneg %p415
        $region86: #{tpu_custom_call.1} parent=75 // pred_check_branch
          %1863 = sbr.rel (%p1861) target = $region88
        $region87: #{tpu_custom_call.1} parent=75 // pred_region
          %1865 = dma.done [#allocation3], 256
        $region88: #{tpu_custom_call.1} parent=75 // pred_fallthru
          _
      $region76: #{tpu_custom_call.1} parent=5 // pred_fallthru
        _
      %p1866 = scmp.le.s32.totalorder 2, %s21
      // Predicated region
      $region89: #{tpu_custom_call.1} parent=5 // pred_check
        %p1867 = pneg %p1866
      $region90: #{tpu_custom_call.1} parent=5 // pred_check_branch
        %1869 = sbr.rel (%p1867) target = $region92
      $region91: #{tpu_custom_call.1} parent=5 // pred_region
        %s1870 = ssub.s32 %s21, 2
      $region92: #{tpu_custom_call.1} parent=5 // pred_fallthru
        _
    $region6: #{tpu_custom_call.1} parent=1 // loop_footer
      %s25 = sadd.s32 1, %s21
    $region7: #{tpu_custom_call.1} parent=1 // loop_footer_branch
      %20 = sbr.rel target = $region3
    $region8: #{tpu_custom_call.1} parent=1 // loop_exit
      _
    %1871 = vsyncpa [#allocation3], 1
    %s1872 = scalar_lea.sflag [#allocation3], 1
    %1873 = vsyncpa %s1872, 1

</llo_original>
